<compile_context>
chip_gen: v7x
topology: tpu7x:2x2x1
jax: 0.10.0
libtpu: 0.0.40
codegen_flags: <defaults>
</compile_context>

<pallas_src>
import jax
import jax.numpy as jnp
from jax.experimental import pallas as pl
from jax.experimental.pallas import tpu as pltpu

EPS = 1e-5


# ---------------------------------------------------------------------------
# Kernels
# ---------------------------------------------------------------------------
def _shifted_taps_f32(x):
    """x: (H, W*C) f32, one image.  Return the three H-shifted copies for the
    kh = 0,1,2 taps of a 3x3 'same' conv (zero rows where the shift runs off
    the image).  Shifts use pltpu.roll (XLU, 32-bit path) + a one-row mask
    instead of sublane-misaligned slices."""
    H, WC = x.shape
    rid = jax.lax.broadcasted_iota(jnp.int32, (H, WC), 0)
    zero = jnp.zeros_like(x)
    tap0 = jnp.where(rid == 0, zero, pltpu.roll(x, shift=1, axis=0))       # row h-1
    tap2 = jnp.where(rid == H - 1, zero, pltpu.roll(x, shift=H - 1, axis=0))  # row h+1
    return tap0, x, tap2


def _make_conv_stats_kernel(apply_bn_relu):
    """Per-image kernel: (optionally bn+relu the input, then) 3x3 conv via a
    single K-fused MXU matmul, plus per-image BN partial sums (s1, s2)."""

    def conv_body(src_f32, tw_ref, y_ref, st_ref):
        tap0, tap1, tap2 = _shifted_taps_f32(src_f32)
        # (H, 3*W*Cin) bf16 LHS against (3*W*Cin, W*Cout) bf16 Toeplitz RHS.
        lhs = jnp.concatenate([tap0, tap1, tap2], axis=1).astype(jnp.bfloat16)
        y = jnp.dot(lhs, tw_ref[...], preferred_element_type=jnp.float32)
        s1 = jnp.sum(y, axis=0, keepdims=True)
        s2 = jnp.sum(y * y, axis=0, keepdims=True)
        y_ref[0] = y                                           # (H, W*Cout) f32
        st_ref[0] = jnp.concatenate([s1, s2], axis=0)          # (2, W*Cout) f32

    if apply_bn_relu:
        def kernel(x_ref, scale_ref, shift_ref, tw_ref, y_ref, st_ref):
            a = jnp.maximum(x_ref[0] * scale_ref[...] + shift_ref[...], 0.0)
            conv_body(a, tw_ref, y_ref, st_ref)
    else:
        def kernel(x_ref, tw_ref, y_ref, st_ref):
            conv_body(x_ref[0].astype(jnp.float32), tw_ref, y_ref, st_ref)
    return kernel


def _bn_relu_kernel(y_ref, scale_ref, shift_ref, o_ref):
    """Final elementwise bn2 + relu, one image per grid step."""
    o_ref[0] = jnp.maximum(y_ref[0] * scale_ref[...] + shift_ref[...], 0.0)


# ---------------------------------------------------------------------------
# Weight / BN-stat repacking (wrapper-side glue; in a real model do once)
# ---------------------------------------------------------------------------
def _banded_conv_weights(w_oihw, W):
    """OIHW 3x3 conv weight -> (3*W*Cin, W*Cout) bf16 banded block-Toeplitz.
    Row index kh*(W*Cin)+wp*Cin+ci, column w*Cout+co holds
    weight[co, ci, kh, wp-w+1] when |wp-w| <= 1 and 0 otherwise, so the
    K-fused matmul of the shifted/concatenated activations against it is
    exactly the 3x3 'same' conv including the zero padding along W."""
    Cout, Cin = w_oihw.shape[0], w_oihw.shape[1]
    taps = jnp.transpose(w_oihw, (2, 3, 1, 0)).astype(jnp.float32)  # (kh,kw,Ci,Co)
    src = jnp.arange(W)[:, None]          # wp: input column
    dst = jnp.arange(W)[None, :]          # w : output column
    kw = src - dst + 1                    # (W, W)
    valid = ((kw >= 0) & (kw <= 2)).astype(jnp.float32)
    blk = taps[:, jnp.clip(kw, 0, 2)]     # (3, W, W, Cin, Cout)
    blk = blk * valid[None, :, :, None, None]
    T = jnp.transpose(blk, (0, 1, 3, 2, 4)).reshape(3 * W * Cin, W * Cout)
    return T.astype(jnp.bfloat16)


def _bn_affine_from_stats(stats, gamma, beta, count, W, C):
    """Reduce per-image partial sums -> per-channel mean/var -> per-lane
    scale/shift (train-mode BN, biased variance)."""
    s = stats.reshape(-1, 2, W, C).sum(axis=(0, 2))    # (2, C)
    mean = s[0] / count
    var = s[1] / count - mean * mean                   # single-pass, f32
    scale = gamma * jax.lax.rsqrt(var + EPS)
    shift = beta - mean * scale
    scale_l = jnp.tile(scale.reshape(1, C), (1, W)).astype(jnp.float32)
    shift_l = jnp.tile(shift.reshape(1, C), (1, W)).astype(jnp.float32)
    return scale_l, shift_l                            # (1, W*C) each


# ---------------------------------------------------------------------------
# Forward
# ---------------------------------------------------------------------------
@jax.jit
def block_forward(x_nchw, w1_oihw, g1, b1, w2_oihw, g2, b2):
    """x_nchw: (N, C, H, W) float32; conv weights in PyTorch OIHW layout."""
    N, Cin, H, W = x_nchw.shape
    Cout = w1_oihw.shape[0]
    assert Cin == Cout, "module only type-checks when inplanes == planes"
    WC_in, WC_out = W * Cin, W * Cout
    count = float(N * H * W)

    # Layout glue: NCHW -> lane-dense (N, H, W*Cin), staged to HBM as bf16.
    x_rows = (jnp.transpose(x_nchw, (0, 2, 3, 1))
              .reshape(N, H, WC_in).astype(jnp.bfloat16))

    t1 = _banded_conv_weights(w1_oihw, W)   # (3*W*Cin,  W*Cout) bf16
    t2 = _banded_conv_weights(w2_oihw, W)   # (3*W*Cout, W*Cout) bf16

    par = pltpu.CompilerParams(dimension_semantics=("parallel",))
    img = lambda n: (n, 0, 0)               # per-image block
    const2 = lambda n: (0, 0)               # resident (weights / affine)

    out_specs_conv = (pl.BlockSpec((1, H, WC_out), img),
                      pl.BlockSpec((1, 2, WC_out), img))
    out_shape_conv = (jax.ShapeDtypeStruct((N, H, WC_out), jnp.float32),
                      jax.ShapeDtypeStruct((N, 2, WC_out), jnp.float32))

    # --- stage 1: conv1 + per-image BN1 partial sums ------------------------
    y1, st1 = pl.pallas_call(
        _make_conv_stats_kernel(apply_bn_relu=False),
        grid=(N,),
        in_specs=[pl.BlockSpec((1, H, WC_in), img),
                  pl.BlockSpec((3 * WC_in, WC_out), const2)],
        out_specs=out_specs_conv,
        out_shape=out_shape_conv,
        compiler_params=par,
        cost_estimate=pl.CostEstimate(
            flops=2 * N * H * 3 * WC_in * WC_out, transcendentals=0,
            bytes_accessed=(N * H * WC_in * 2 + 3 * WC_in * WC_out * 2
                            + N * H * WC_out * 4 + N * 2 * WC_out * 4)),
    )(x_rows, t1)

    scale1, shift1 = _bn_affine_from_stats(st1, g1, b1, count, W, Cout)

    # --- stage 2: bn1 + relu + conv2 + per-image BN2 partial sums -----------
    y2, st2 = pl.pallas_call(
        _make_conv_stats_kernel(apply_bn_relu=True),
        grid=(N,),
        in_specs=[pl.BlockSpec((1, H, WC_out), img),
                  pl.BlockSpec((1, WC_out), const2),
                  pl.BlockSpec((1, WC_out), const2),
                  pl.BlockSpec((3 * WC_out, WC_out), const2)],
        out_specs=out_specs_conv,
        out_shape=out_shape_conv,
        compiler_params=par,
        cost_estimate=pl.CostEstimate(
            flops=2 * N * H * 3 * WC_out * WC_out, transcendentals=0,
            bytes_accessed=(N * H * WC_out * 4 + 3 * WC_out * WC_out * 2
                            + N * H * WC_out * 4 + N * 2 * WC_out * 4)),
    )(y1, scale1, shift1, t2)

    scale2, shift2 = _bn_affine_from_stats(st2, g2, b2, count, W, Cout)

    # --- stage 3: bn2 + relu -------------------------------------------------
    out_rows = pl.pallas_call(
        _bn_relu_kernel,
        grid=(N,),
        in_specs=[pl.BlockSpec((1, H, WC_out), img),
                  pl.BlockSpec((1, WC_out), const2),
                  pl.BlockSpec((1, WC_out), const2)],
        out_specs=pl.BlockSpec((1, H, WC_out), img),
        out_shape=jax.ShapeDtypeStruct((N, H, WC_out), jnp.float32),
        compiler_params=par,
    )(y2, scale2, shift2)

    # lane-dense (N, H, W*Cout) -> NCHW
    return jnp.transpose(out_rows.reshape(N, H, W, Cout), (0, 3, 1, 2))


# ---------------------------------------------------------------------------
# Pure-JAX reference (mirrors PyTorch train-mode forward with bf16 MXU
# operands / f32 accumulation, matching the kernel's numerics)
# ---------------------------------------------------------------------------
def block_reference(x_nchw, w1, g1, b1, w2, g2, b2):
    def conv(x, w):
        return jax.lax.conv_general_dilated(
            x.astype(jnp.bfloat16), w.astype(jnp.bfloat16),
            window_strides=(1, 1), padding=((1, 1), (1, 1)),
            dimension_numbers=('NCHW', 'OIHW', 'NCHW'),
            preferred_element_type=jnp.float32)

    def bn_relu(x, g, b):
        mean = jnp.mean(x, axis=(0, 2, 3), keepdims=True)
        var = jnp.mean((x - mean) ** 2, axis=(0, 2, 3), keepdims=True)  # biased
        y = (x - mean) * jax.lax.rsqrt(var + EPS)
        y = y * g.reshape(1, -1, 1, 1) + b.reshape(1, -1, 1, 1)
        return jnp.maximum(y, 0.0)

    y = bn_relu(conv(x_nchw, w1), g1, b1)
    return bn_relu(conv(y, w2), g2, b2)


if __name__ == "__main__":
    # Small shapes consistent with the module: inplanes == planes == 8,
    # W*C = 128 (lane-dense), 4 images so the grid actually pipelines.
    N, C, H, W = 4, 8, 16, 16
    key = jax.random.PRNGKey(0)
    kx, k1, k2, kg1, kb1, kg2, kb2 = jax.random.split(key, 7)

    x = jax.random.normal(kx, (N, C, H, W), jnp.float32)

    # deterministic synthetic parameters (PyTorch shapes)
    w1 = jax.random.normal(k1, (C, C, 3, 3), jnp.float32) * 0.1   # conv1.weight
    w2 = jax.random.normal(k2, (C, C, 3, 3), jnp.float32) * 0.1   # conv2.weight
    g1 = 1.0 + 0.1 * jax.random.normal(kg1, (C,), jnp.float32)    # bn1.weight
    b1 = 0.1 * jax.random.normal(kb1, (C,), jnp.float32)          # bn1.bias
    g2 = 1.0 + 0.1 * jax.random.normal(kg2, (C,), jnp.float32)    # bn2.weight
    b2 = 0.1 * jax.random.normal(kb2, (C,), jnp.float32)          # bn2.bias

    out = jax.block_until_ready(block_forward(x, w1, g1, b1, w2, g2, b2))
    ref = jax.block_until_ready(block_reference(x, w1, g1, b1, w2, g2, b2))

    assert out.shape == (N, C, H, W), out.shape
    max_err = float(jnp.max(jnp.abs(out - ref)))
    assert jnp.allclose(out, ref, atol=3e-3, rtol=3e-3), max_err

    print("KERNEL_OK")
</pallas_src>

<mosaic_0001>
module attributes {stable_mosaic.version = 11 : i64} {
  func.func @kernel(%arg0: i32, %arg1: memref<1x16x128xbf16, #tpu.memory_space<vmem>>, %arg2: memref<384x128xbf16, #tpu.memory_space<vmem>>, %arg3: memref<1x16x128xf32, #tpu.memory_space<vmem>>, %arg4: memref<1x2x128xf32, #tpu.memory_space<vmem>>) attributes {dimension_semantics = [#tpu.dimension_semantics<parallel>], iteration_bounds = array<i64: 4>, scalar_prefetch = 0 : i64, scratch_operands = 0 : i64, tpu.core_type = #tpu.core_type<tc>, window_params = [{transform_indices = @transform_0, window_bounds = array<i64: 1, 16, 128>}, {pipeline_mode = #tpu.pipeline_mode<synchronous>, transform_indices = @transform_1, window_bounds = array<i64: 384, 128>}, {transform_indices = @transform_2, window_bounds = array<i64: 1, 16, 128>}, {transform_indices = @transform_3, window_bounds = array<i64: 1, 2, 128>}]} {
    %c0 = arith.constant 0 : index
    %c0_0 = arith.constant 0 : index
    %c0_1 = arith.constant 0 : index
    %0 = vector.load %arg1[%c0, %c0_0, %c0_1] : memref<1x16x128xbf16, #tpu.memory_space<vmem>>, vector<1x16x128xbf16>
    %1 = vector.shape_cast %0 : vector<1x16x128xbf16> to vector<16x128xbf16>
    %2 = arith.extf %1 : vector<16x128xbf16> to vector<16x128xf32>
    %3 = tpu.iota {dimensions = array<i32: 0>} : vector<16x128xi32>
    %cst = arith.constant 0.000000e+00 : f32
    %4 = vector.broadcast %cst : f32 to vector<16x128xf32>
    %c0_i32 = arith.constant 0 : i32
    %5 = vector.broadcast %c0_i32 : i32 to vector<16x128xi32>
    %6 = arith.cmpi eq, %3, %5 : vector<16x128xi32>
    %c1_i32 = arith.constant 1 : i32
    %7 = tpu.dynamic_rotate %2 by %c1_i32 dim 0 : vector<16x128xf32>, i32 -> vector<16x128xf32>
    %8 = arith.select %6, %4, %7 : vector<16x128xi1>, vector<16x128xf32>
    %c15_i32 = arith.constant 15 : i32
    %9 = vector.broadcast %c15_i32 : i32 to vector<16x128xi32>
    %10 = arith.cmpi eq, %3, %9 : vector<16x128xi32>
    %c15_i32_2 = arith.constant 15 : i32
    %11 = tpu.dynamic_rotate %2 by %c15_i32_2 dim 0 : vector<16x128xf32>, i32 -> vector<16x128xf32>
    %12 = arith.select %10, %4, %11 : vector<16x128xi1>, vector<16x128xf32>
    %13 = tpu.concatenate %8, %2, %12 in 1 : vector<16x128xf32>, vector<16x128xf32>, vector<16x128xf32> -> vector<16x384xf32>
    %14 = arith.truncf %13 : vector<16x384xf32> to vector<16x384xbf16>
    %c0_3 = arith.constant 0 : index
    %c0_4 = arith.constant 0 : index
    %15 = vector.load %arg2[%c0_3, %c0_4] : memref<384x128xbf16, #tpu.memory_space<vmem>>, vector<384x128xbf16>
    %cst_5 = arith.constant dense<0.000000e+00> : vector<16x128xf32>
    %16 = tpu.matmul %14, %15, %cst_5 {dimension_numbers = #tpu.dot_dimension_numbers<[1], [0], [0], [1], [0, 0, 1, 1], [], []>} : vector<16x384xbf16>, vector<384x128xbf16>, vector<16x128xf32> -> vector<16x128xf32>
    %cst_6 = arith.constant dense<0.000000e+00> : vector<128xf32>
    %17 = vector.multi_reduction <add>, %16, %cst_6 [0] : vector<16x128xf32> to vector<128xf32>
    %18 = vector.shape_cast %17 : vector<128xf32> to vector<1x128xf32>
    %19 = arith.mulf %16, %16 : vector<16x128xf32>
    %cst_7 = arith.constant dense<0.000000e+00> : vector<128xf32>
    %20 = vector.multi_reduction <add>, %19, %cst_7 [0] : vector<16x128xf32> to vector<128xf32>
    %21 = vector.shape_cast %20 : vector<128xf32> to vector<1x128xf32>
    %c0_8 = arith.constant 0 : index
    %c0_9 = arith.constant 0 : index
    %c0_10 = arith.constant 0 : index
    %22 = vector.load %arg3[%c0_8, %c0_9, %c0_10] : memref<1x16x128xf32, #tpu.memory_space<vmem>>, vector<1x16x128xf32>
    %23 = vector.shape_cast %22 : vector<1x16x128xf32> to vector<16x128xf32>
    %24 = vector.shape_cast %16 : vector<16x128xf32> to vector<1x16x128xf32>
    tpu.vector_store %arg3[%c0_8, %c0_9, %c0_10], %24 {strides = array<i32>} : memref<1x16x128xf32, #tpu.memory_space<vmem>>, vector<1x16x128xf32>,
    %25 = tpu.concatenate %18, %21 in 0 : vector<1x128xf32>, vector<1x128xf32> -> vector<2x128xf32>
    %c0_11 = arith.constant 0 : index
    %c0_12 = arith.constant 0 : index
    %c0_13 = arith.constant 0 : index
    %26 = vector.load %arg4[%c0_11, %c0_12, %c0_13] : memref<1x2x128xf32, #tpu.memory_space<vmem>>, vector<1x2x128xf32>
    %27 = vector.shape_cast %26 : vector<1x2x128xf32> to vector<2x128xf32>
    %28 = vector.shape_cast %25 : vector<2x128xf32> to vector<1x2x128xf32>
    tpu.vector_store %arg4[%c0_11, %c0_12, %c0_13], %28 {strides = array<i32>} : memref<1x2x128xf32, #tpu.memory_space<vmem>>, vector<1x2x128xf32>,
    return
  }
  func.func @transform_0(%arg0: i32) -> (i32, i32, i32) {
    %c0_i32 = arith.constant 0 : i32
    %c0_i32_0 = arith.constant 0 : i32
    %c0_i32_1 = arith.constant 0 : i32
    return %arg0, %c0_i32, %c0_i32_0 : i32, i32, i32
  }
  func.func @transform_1(%arg0: i32) -> (i32, i32) {
    %c0_i32 = arith.constant 0 : i32
    %c0_i32_0 = arith.constant 0 : i32
    %c0_i32_1 = arith.constant 0 : i32
    return %c0_i32, %c0_i32_0 : i32, i32
  }
  func.func @transform_2(%arg0: i32) -> (i32, i32, i32) {
    %c0_i32 = arith.constant 0 : i32
    %c0_i32_0 = arith.constant 0 : i32
    %c0_i32_1 = arith.constant 0 : i32
    return %arg0, %c0_i32, %c0_i32_0 : i32, i32, i32
  }
  func.func @transform_3(%arg0: i32) -> (i32, i32, i32) {
    %c0_i32 = arith.constant 0 : i32
    %c0_i32_0 = arith.constant 0 : i32
    %c0_i32_1 = arith.constant 0 : i32
    return %arg0, %c0_i32, %c0_i32_0 : i32, i32, i32
  }
}

module attributes {stable_mosaic.version = 11 : i64} {
  func.func @_bn_relu_kernel(%arg0: i32, %arg1: memref<1x16x128xf32, #tpu.memory_space<vmem>>, %arg2: memref<1x128xf32, #tpu.memory_space<vmem>>, %arg3: memref<1x128xf32, #tpu.memory_space<vmem>>, %arg4: memref<1x16x128xf32, #tpu.memory_space<vmem>>) attributes {dimension_semantics = [#tpu.dimension_semantics<parallel>], iteration_bounds = array<i64: 4>, scalar_prefetch = 0 : i64, scratch_operands = 0 : i64, tpu.core_type = #tpu.core_type<tc>, window_params = [{transform_indices = @transform_0, window_bounds = array<i64: 1, 16, 128>}, {pipeline_mode = #tpu.pipeline_mode<synchronous>, transform_indices = @transform_1, window_bounds = array<i64: 1, 128>}, {pipeline_mode = #tpu.pipeline_mode<synchronous>, transform_indices = @transform_2, window_bounds = array<i64: 1, 128>}, {transform_indices = @transform_3, window_bounds = array<i64: 1, 16, 128>}]} {
    %c0 = arith.constant 0 : index
    %c0_0 = arith.constant 0 : index
    %c0_1 = arith.constant 0 : index
    %0 = vector.load %arg1[%c0, %c0_0, %c0_1] : memref<1x16x128xf32, #tpu.memory_space<vmem>>, vector<1x16x128xf32>
    %1 = vector.shape_cast %0 : vector<1x16x128xf32> to vector<16x128xf32>
    %c0_2 = arith.constant 0 : index
    %c0_3 = arith.constant 0 : index
    %2 = vector.load %arg2[%c0_2, %c0_3] : memref<1x128xf32, #tpu.memory_space<vmem>>, vector<1x128xf32>
    %3 = vector.broadcast %2 : vector<1x128xf32> to vector<16x128xf32>
    %4 = arith.mulf %1, %3 : vector<16x128xf32>
    %c0_4 = arith.constant 0 : index
    %c0_5 = arith.constant 0 : index
    %5 = vector.load %arg3[%c0_4, %c0_5] : memref<1x128xf32, #tpu.memory_space<vmem>>, vector<1x128xf32>
    %6 = vector.broadcast %5 : vector<1x128xf32> to vector<16x128xf32>
    %7 = arith.addf %4, %6 : vector<16x128xf32>
    %cst = arith.constant 0.000000e+00 : f32
    %8 = vector.broadcast %cst : f32 to vector<16x128xf32>
    %9 = arith.maximumf %7, %8 : vector<16x128xf32>
    %c0_6 = arith.constant 0 : index
    %c0_7 = arith.constant 0 : index
    %c0_8 = arith.constant 0 : index
    %10 = vector.load %arg4[%c0_6, %c0_7, %c0_8] : memref<1x16x128xf32, #tpu.memory_space<vmem>>, vector<1x16x128xf32>
    %11 = vector.shape_cast %10 : vector<1x16x128xf32> to vector<16x128xf32>
    %12 = vector.shape_cast %9 : vector<16x128xf32> to vector<1x16x128xf32>
    tpu.vector_store %arg4[%c0_6, %c0_7, %c0_8], %12 {strides = array<i32>} : memref<1x16x128xf32, #tpu.memory_space<vmem>>, vector<1x16x128xf32>,
    return
  }
  func.func @transform_0(%arg0: i32) -> (i32, i32, i32) {
    %c0_i32 = arith.constant 0 : i32
    %c0_i32_0 = arith.constant 0 : i32
    %c0_i32_1 = arith.constant 0 : i32
    return %arg0, %c0_i32, %c0_i32_0 : i32, i32, i32
  }
  func.func @transform_1(%arg0: i32) -> (i32, i32) {
    %c0_i32 = arith.constant 0 : i32
    %c0_i32_0 = arith.constant 0 : i32
    %c0_i32_1 = arith.constant 0 : i32
    return %c0_i32, %c0_i32_0 : i32, i32
  }
  func.func @transform_2(%arg0: i32) -> (i32, i32) {
    %c0_i32 = arith.constant 0 : i32
    %c0_i32_0 = arith.constant 0 : i32
    %c0_i32_1 = arith.constant 0 : i32
    return %c0_i32, %c0_i32_0 : i32, i32
  }
  func.func @transform_3(%arg0: i32) -> (i32, i32, i32) {
    %c0_i32 = arith.constant 0 : i32
    %c0_i32_0 = arith.constant 0 : i32
    %c0_i32_1 = arith.constant 0 : i32
    return %arg0, %c0_i32, %c0_i32_0 : i32, i32, i32
  }
}

module attributes {stable_mosaic.version = 11 : i64} {
  func.func @kernel(%arg0: i32, %arg1: memref<1x16x128xf32, #tpu.memory_space<vmem>>, %arg2: memref<1x128xf32, #tpu.memory_space<vmem>>, %arg3: memref<1x128xf32, #tpu.memory_space<vmem>>, %arg4: memref<384x128xbf16, #tpu.memory_space<vmem>>, %arg5: memref<1x16x128xf32, #tpu.memory_space<vmem>>, %arg6: memref<1x2x128xf32, #tpu.memory_space<vmem>>) attributes {dimension_semantics = [#tpu.dimension_semantics<parallel>], iteration_bounds = array<i64: 4>, scalar_prefetch = 0 : i64, scratch_operands = 0 : i64, tpu.core_type = #tpu.core_type<tc>, window_params = [{transform_indices = @transform_0, window_bounds = array<i64: 1, 16, 128>}, {pipeline_mode = #tpu.pipeline_mode<synchronous>, transform_indices = @transform_1, window_bounds = array<i64: 1, 128>}, {pipeline_mode = #tpu.pipeline_mode<synchronous>, transform_indices = @transform_2, window_bounds = array<i64: 1, 128>}, {pipeline_mode = #tpu.pipeline_mode<synchronous>, transform_indices = @transform_3, window_bounds = array<i64: 384, 128>}, {transform_indices = @transform_4, window_bounds = array<i64: 1, 16, 128>}, {transform_indices = @transform_5, window_bounds = array<i64: 1, 2, 128>}]} {
    %c0 = arith.constant 0 : index
    %c0_0 = arith.constant 0 : index
    %c0_1 = arith.constant 0 : index
    %0 = vector.load %arg1[%c0, %c0_0, %c0_1] : memref<1x16x128xf32, #tpu.memory_space<vmem>>, vector<1x16x128xf32>
    %1 = vector.shape_cast %0 : vector<1x16x128xf32> to vector<16x128xf32>
    %c0_2 = arith.constant 0 : index
    %c0_3 = arith.constant 0 : index
    %2 = vector.load %arg2[%c0_2, %c0_3] : memref<1x128xf32, #tpu.memory_space<vmem>>, vector<1x128xf32>
    %3 = vector.broadcast %2 : vector<1x128xf32> to vector<16x128xf32>
    %4 = arith.mulf %1, %3 : vector<16x128xf32>
    %c0_4 = arith.constant 0 : index
    %c0_5 = arith.constant 0 : index
    %5 = vector.load %arg3[%c0_4, %c0_5] : memref<1x128xf32, #tpu.memory_space<vmem>>, vector<1x128xf32>
    %6 = vector.broadcast %5 : vector<1x128xf32> to vector<16x128xf32>
    %7 = arith.addf %4, %6 : vector<16x128xf32>
    %cst = arith.constant 0.000000e+00 : f32
    %8 = vector.broadcast %cst : f32 to vector<16x128xf32>
    %9 = arith.maximumf %7, %8 : vector<16x128xf32>
    %10 = tpu.iota {dimensions = array<i32: 0>} : vector<16x128xi32>
    %cst_6 = arith.constant 0.000000e+00 : f32
    %11 = vector.broadcast %cst_6 : f32 to vector<16x128xf32>
    %c0_i32 = arith.constant 0 : i32
    %12 = vector.broadcast %c0_i32 : i32 to vector<16x128xi32>
    %13 = arith.cmpi eq, %10, %12 : vector<16x128xi32>
    %c1_i32 = arith.constant 1 : i32
    %14 = tpu.dynamic_rotate %9 by %c1_i32 dim 0 : vector<16x128xf32>, i32 -> vector<16x128xf32>
    %15 = arith.select %13, %11, %14 : vector<16x128xi1>, vector<16x128xf32>
    %c15_i32 = arith.constant 15 : i32
    %16 = vector.broadcast %c15_i32 : i32 to vector<16x128xi32>
    %17 = arith.cmpi eq, %10, %16 : vector<16x128xi32>
    %c15_i32_7 = arith.constant 15 : i32
    %18 = tpu.dynamic_rotate %9 by %c15_i32_7 dim 0 : vector<16x128xf32>, i32 -> vector<16x128xf32>
    %19 = arith.select %17, %11, %18 : vector<16x128xi1>, vector<16x128xf32>
    %20 = tpu.concatenate %15, %9, %19 in 1 : vector<16x128xf32>, vector<16x128xf32>, vector<16x128xf32> -> vector<16x384xf32>
    %21 = arith.truncf %20 : vector<16x384xf32> to vector<16x384xbf16>
    %c0_8 = arith.constant 0 : index
    %c0_9 = arith.constant 0 : index
    %22 = vector.load %arg4[%c0_8, %c0_9] : memref<384x128xbf16, #tpu.memory_space<vmem>>, vector<384x128xbf16>
    %cst_10 = arith.constant dense<0.000000e+00> : vector<16x128xf32>
    %23 = tpu.matmul %21, %22, %cst_10 {dimension_numbers = #tpu.dot_dimension_numbers<[1], [0], [0], [1], [0, 0, 1, 1], [], []>} : vector<16x384xbf16>, vector<384x128xbf16>, vector<16x128xf32> -> vector<16x128xf32>
    %cst_11 = arith.constant dense<0.000000e+00> : vector<128xf32>
    %24 = vector.multi_reduction <add>, %23, %cst_11 [0] : vector<16x128xf32> to vector<128xf32>
    %25 = vector.shape_cast %24 : vector<128xf32> to vector<1x128xf32>
    %26 = arith.mulf %23, %23 : vector<16x128xf32>
    %cst_12 = arith.constant dense<0.000000e+00> : vector<128xf32>
    %27 = vector.multi_reduction <add>, %26, %cst_12 [0] : vector<16x128xf32> to vector<128xf32>
    %28 = vector.shape_cast %27 : vector<128xf32> to vector<1x128xf32>
    %c0_13 = arith.constant 0 : index
    %c0_14 = arith.constant 0 : index
    %c0_15 = arith.constant 0 : index
    %29 = vector.load %arg5[%c0_13, %c0_14, %c0_15] : memref<1x16x128xf32, #tpu.memory_space<vmem>>, vector<1x16x128xf32>
    %30 = vector.shape_cast %29 : vector<1x16x128xf32> to vector<16x128xf32>
    %31 = vector.shape_cast %23 : vector<16x128xf32> to vector<1x16x128xf32>
    tpu.vector_store %arg5[%c0_13, %c0_14, %c0_15], %31 {strides = array<i32>} : memref<1x16x128xf32, #tpu.memory_space<vmem>>, vector<1x16x128xf32>,
    %32 = tpu.concatenate %25, %28 in 0 : vector<1x128xf32>, vector<1x128xf32> -> vector<2x128xf32>
    %c0_16 = arith.constant 0 : index
    %c0_17 = arith.constant 0 : index
    %c0_18 = arith.constant 0 : index
    %33 = vector.load %arg6[%c0_16, %c0_17, %c0_18] : memref<1x2x128xf32, #tpu.memory_space<vmem>>, vector<1x2x128xf32>
    %34 = vector.shape_cast %33 : vector<1x2x128xf32> to vector<2x128xf32>
    %35 = vector.shape_cast %32 : vector<2x128xf32> to vector<1x2x128xf32>
    tpu.vector_store %arg6[%c0_16, %c0_17, %c0_18], %35 {strides = array<i32>} : memref<1x2x128xf32, #tpu.memory_space<vmem>>, vector<1x2x128xf32>,
    return
  }
  func.func @transform_0(%arg0: i32) -> (i32, i32, i32) {
    %c0_i32 = arith.constant 0 : i32
    %c0_i32_0 = arith.constant 0 : i32
    %c0_i32_1 = arith.constant 0 : i32
    return %arg0, %c0_i32, %c0_i32_0 : i32, i32, i32
  }
  func.func @transform_1(%arg0: i32) -> (i32, i32) {
    %c0_i32 = arith.constant 0 : i32
    %c0_i32_0 = arith.constant 0 : i32
    %c0_i32_1 = arith.constant 0 : i32
    return %c0_i32, %c0_i32_0 : i32, i32
  }
  func.func @transform_2(%arg0: i32) -> (i32, i32) {
    %c0_i32 = arith.constant 0 : i32
    %c0_i32_0 = arith.constant 0 : i32
    %c0_i32_1 = arith.constant 0 : i32
    return %c0_i32, %c0_i32_0 : i32, i32
  }
  func.func @transform_3(%arg0: i32) -> (i32, i32) {
    %c0_i32 = arith.constant 0 : i32
    %c0_i32_0 = arith.constant 0 : i32
    %c0_i32_1 = arith.constant 0 : i32
    return %c0_i32, %c0_i32_0 : i32, i32
  }
  func.func @transform_4(%arg0: i32) -> (i32, i32, i32) {
    %c0_i32 = arith.constant 0 : i32
    %c0_i32_0 = arith.constant 0 : i32
    %c0_i32_1 = arith.constant 0 : i32
    return %arg0, %c0_i32, %c0_i32_0 : i32, i32, i32
  }
  func.func @transform_5(%arg0: i32) -> (i32, i32, i32) {
    %c0_i32 = arith.constant 0 : i32
    %c0_i32_0 = arith.constant 0 : i32
    %c0_i32_1 = arith.constant 0 : i32
    return %arg0, %c0_i32, %c0_i32_0 : i32, i32, i32
  }
}

</mosaic_0001>

<llo_original>
// kernel: block_forward.3
$region0: #{block_forward.3}
  #allocation0 [shape = 'u32[]', space=smem, size = 0x4, offset = 0x4, fixed_abs, tag = 'smem constant byte address 0x4 - core index']
  #allocation1 [shape = 'u32[144,128]{1,0:T(1,128)}', space=vmem, size = 0x12000, scoped, tag = 'internal scratch']
  %s0 = inlined_call_operand.vmem [shape: bf16[4,16,128], index: 0, kind: input, shape index: {}]
  %s1 = inlined_call_operand.vmem [shape: bf16[384,128], index: 1, kind: input, shape index: {}]
  %s2 = inlined_call_operand.vmem [shape: f32[4,16,128], index: 2, kind: output, shape index: {0}]
  %s3 = inlined_call_operand.vmem [shape: f32[4,2,128], index: 3, kind: output, shape index: {1}]
  %4 = xla_tuple %s2, %s3
  %s5 = sld [smem:[#allocation0]]
  $region49: #{block_forward.3} parent=0
    _
  %s7 = ssub.s32 1, %s5
  %s8 = scalar_select 0, %s7, %s5
  loop: start=0, step=1, limit=6
  $region2: #{block_forward.3} parent=0 // loop_pre_header
    _
  $region3: #{block_forward.3} parent=0 // loop_header
    %s10 = sphi 0, %s14
    %p11 = scmp.ge.s32.totalorder %s10, 6
    %s20 = sphi 0, %s22
    %s23 = sphi 0, %s20
    %s24 = sphi 0, %s23
    %s40 = sphi 0, %s24
    %s44 = sphi 0, %s44
    %s46 = sphi 0, %s44
    %s47 = sphi 0, %s46
    %s61 = sphi 0, %s47
    %s67 = sphi 0, %s69
    %s70 = sphi 0, %s67
    %s71 = sphi 0, %s70
    %s87 = sphi 0, %s71
    %s93 = sphi 0, %s95
    %s96 = sphi 0, %s93
    %s97 = sphi 0, %s96
    %s113 = sphi 0, %s97
  $region4: #{block_forward.3} parent=0 // loop_header_branch
    %13 = sbr.rel (%p11) target = $region8
  $region5: #{block_forward.3} parent=0 // loop_body
    %s15 = ssub.s32 %s10, 1
    %s16 = ssub.s32 %s10, 2
    %s17 = sadd.s32 %s10, 1
    %s18 = ssub.s32 %s10, %s17
    %p19 = scmp.eq.s32.totalorder %s18, 0
    %s21 = sadd.s32 %s20, 1
    %s22 = scalar_select %p19, %s20, %s21
    %p25 = pneg %p19
    %p26 = scmp.eq.s32.totalorder %s10, 3
    %p27 = por %p25, %p26
    %p28 = scmp.ne.s32.totalorder %s20, %s23
    %p29 = scmp.eq.s32.totalorder %s10, 0
    %p30 = por %p28, %p29
    %p31 = scmp.ne.s32.totalorder %s20, %s23
    %p32 = scmp.eq.s32.totalorder %s15, 3
    %p33 = por %p31, %p32
    %p34 = scmp.ne.s32.totalorder %s23, %s24
    %p35 = scmp.eq.s32.totalorder %s15, 0
    %p36 = por %p34, %p35
    %p37 = scmp.ne.s32.totalorder %s23, %s24
    %p38 = scmp.eq.s32.totalorder %s16, 3
    %p39 = por %p37, %p38
    %p41 = scmp.ne.s32.totalorder %s24, %s40
    %p42 = scmp.eq.s32.totalorder %s16, 0
    %p43 = por %p41, %p42
    %s45 = sadd.s32 %s44, 1
    %p48 = scmp.eq.s32.totalorder %s10, 3
    %p49 = scmp.ne.s32.totalorder %s44, %s46
    %p50 = scmp.eq.s32.totalorder %s10, 0
    %p51 = por %p49, %p50
    %p52 = scmp.ne.s32.totalorder %s44, %s46
    %p53 = scmp.eq.s32.totalorder %s15, 3
    %p54 = por %p52, %p53
    %p55 = scmp.ne.s32.totalorder %s46, %s47
    %p56 = scmp.eq.s32.totalorder %s15, 0
    %p57 = por %p55, %p56
    %p58 = scmp.ne.s32.totalorder %s46, %s47
    %p59 = scmp.eq.s32.totalorder %s16, 3
    %p60 = por %p58, %p59
    %p62 = scmp.ne.s32.totalorder %s47, %s61
    %p63 = scmp.eq.s32.totalorder %s16, 0
    %p64 = por %p62, %p63
    %s65 = ssub.s32 %s10, %s17
    %p66 = scmp.eq.s32.totalorder %s65, 0
    %s68 = sadd.s32 %s67, 1
    %s69 = scalar_select %p66, %s67, %s68
    %p72 = pneg %p66
    %p73 = scmp.eq.s32.totalorder %s10, 3
    %p74 = por %p72, %p73
    %p75 = scmp.ne.s32.totalorder %s67, %s70
    %p76 = scmp.eq.s32.totalorder %s10, 0
    %p77 = por %p75, %p76
    %p78 = scmp.ne.s32.totalorder %s67, %s70
    %p79 = scmp.eq.s32.totalorder %s15, 3
    %p80 = por %p78, %p79
    %p81 = scmp.ne.s32.totalorder %s70, %s71
    %p82 = scmp.eq.s32.totalorder %s15, 0
    %p83 = por %p81, %p82
    %p84 = scmp.ne.s32.totalorder %s70, %s71
    %p85 = scmp.eq.s32.totalorder %s16, 3
    %p86 = por %p84, %p85
    %p88 = scmp.ne.s32.totalorder %s71, %s87
    %p89 = scmp.eq.s32.totalorder %s16, 0
    %p90 = por %p88, %p89
    %s91 = ssub.s32 %s10, %s17
    %p92 = scmp.eq.s32.totalorder %s91, 0
    %s94 = sadd.s32 %s93, 1
    %s95 = scalar_select %p92, %s93, %s94
    %p98 = pneg %p92
    %p99 = scmp.eq.s32.totalorder %s10, 3
    %p100 = por %p98, %p99
    %p101 = scmp.ne.s32.totalorder %s93, %s96
    %p102 = scmp.eq.s32.totalorder %s10, 0
    %p103 = por %p101, %p102
    %p104 = scmp.ne.s32.totalorder %s93, %s96
    %p105 = scmp.eq.s32.totalorder %s15, 3
    %p106 = por %p104, %p105
    %p107 = scmp.ne.s32.totalorder %s96, %s97
    %p108 = scmp.eq.s32.totalorder %s15, 0
    %p109 = por %p107, %p108
    %p110 = scmp.ne.s32.totalorder %s96, %s97
    %p111 = scmp.eq.s32.totalorder %s16, 3
    %p112 = por %p110, %p111
    %p114 = scmp.ne.s32.totalorder %s97, %s113
    %p115 = scmp.eq.s32.totalorder %s16, 0
    %p116 = por %p114, %p115
    %p117 = scmp.le.s32.totalorder 1, %s10
    %p118 = scmp.lt.s32.totalorder %s10, 5
    %p119 = pnand %p117, %p118
    %p120 = pneg %p119
    // Predicated region
    $region9: #{block_forward.3} parent=5 // pred_check
      _
    $region10: #{block_forward.3} parent=5 // pred_check_branch
      %122 = sbr.rel (%p119) target = $region12
    $region11: #{block_forward.3} parent=5 // pred_region
      %s123 = ssub.s32 %s10, 1
      // Predicated region
      $region13: #{block_forward.3} parent=11 // pred_check
        %p124 = pneg %p57
      $region14: #{block_forward.3} parent=11 // pred_check_branch
        %126 = sbr.rel (%p124) target = $region16
      $region15: #{block_forward.3} parent=11 // pred_region
        _
      $region16: #{block_forward.3} parent=11 // pred_fallthru
        _
    $region12: #{block_forward.3} parent=5 // pred_fallthru
      _
    %p127 = scmp.lt.s32.totalorder %s10, 4
    // Predicated region
    $region17: #{block_forward.3} parent=5 // pred_check
      %p128 = pneg %p127
    $region18: #{block_forward.3} parent=5 // pred_check_branch
      %130 = sbr.rel (%p128) target = $region20
    $region19: #{block_forward.3} parent=5 // pred_region
      // Predicated region
      $region21: #{block_forward.3} parent=19 // pred_check
        %p131 = pneg %p30
      $region22: #{block_forward.3} parent=19 // pred_check_branch
        %133 = sbr.rel (%p131) target = $region24
      $region23: #{block_forward.3} parent=19 // pred_region
        %p134 = scmp.lt.s32.totalorder %s10, 3
        %s135 = scalar_select %p134, %s10, 3
        %s136 = smul.addr %s135, 2
        %s137 = smul.addr %s136, 4
        %s138 = scalar_lea.vmem %s0, %s137
      $region24: #{block_forward.3} parent=19 // pred_fallthru
        _
    $region20: #{block_forward.3} parent=5 // pred_fallthru
      _
    %p139 = scmp.le.s32.totalorder 1, %s10
    %p140 = scmp.lt.s32.totalorder %s10, 5
    %p141 = pnand %p139, %p140
    %p142 = pneg %p141
    // Predicated region
    $region25: #{block_forward.3} parent=5 // pred_check
      _
    $region26: #{block_forward.3} parent=5 // pred_check_branch
      %144 = sbr.rel (%p141) target = $region28
    $region27: #{block_forward.3} parent=5 // pred_region
      %s145 = ssub.s32 %s10, 1
      %p146 = scmp.lt.s32.totalorder %s15, 3
      %s147 = scalar_select %p146, %s15, 3
      %s148 = smul.addr %s147, 2
      %s149 = smul.addr %s148, 4
      %s150 = scalar_lea.vmem %s0, %s149
      %p151 = pneg %p36
      %p152 = pneg %p33
      %p153 = pneg %p57
      %p154 = pneg %p54
      %p155 = pneg %p83
      %p156 = pneg %p80
      %p157 = scmp.lt.s32.totalorder %s15, 3
      %s158 = scalar_select %p157, %s15, 3
      %s159 = smul.addr %s158, 2
      %s160 = smul.addr %s159, 8
      %s161 = scalar_lea.vmem %s2, %s160
      %p162 = pneg %p109
      %p163 = pneg %p106
      %p164 = scmp.lt.s32.totalorder %s15, 3
      %s165 = scalar_select %p164, %s15, 3
      %s166 = smul.addr %s165, 2
      %s167 = scalar_lea.vmem %s3, %s166
      %p168 = scmp.lt.s32.totalorder %s15, 3
      %s169 = scalar_select %p168, %s15, 3
      %s170 = smul.addr %s169, 2
      %s171 = smul.addr %s170, 4
      %s172 = scalar_lea.vmem %s0, %s171
      %p173 = scmp.lt.s32.totalorder %s15, 3
      %s174 = scalar_select %p173, %s15, 3
      %s175 = smul.addr %s174, 2
      %s176 = smul.addr %s175, 8
      %s177 = scalar_lea.vmem %s2, %s176
      %p178 = scmp.lt.s32.totalorder %s15, 3
      %s179 = scalar_select %p178, %s15, 3
      %s180 = smul.addr %s179, 2
      %s181 = scalar_lea.vmem %s3, %s180
      %v183 = vld [vmem:[%s172] sm:$0xf]
      %v184 = vld [vmem:[%s172 + $0x4] sm:$0xf]
      %v185 = vunpack.c.l.bf16 %v183
      %v186 = vunpack.c.l.bf16 %v184
      %v187 = vlaneseq
      %v188 = vshrl.u32 %v187, 7
      %v189 = vadd.s32 %v188, 8
      %vm190 = vcmp.eq.s32.totalorder %v188, 0
      %vm191 = vcmp.eq.s32.totalorder %v189, 0
      %v192 = vrot.slane %v185, 7
      %v193 = vrot.slane %v186, 7
      %vm194 = vcmp.lt.s32.totalorder %v188, 1
      %v195 = vsel %vm194, %v192, %v193
      %v196 = vsel %vm194, %v193, %v192
      %v197 = vsel %vm190, 0.0, %v196
      %v198 = vsel %vm191, 0.0, %v195
      %vm199 = vcmp.eq.s32.totalorder %v188, 15
      %vm200 = vcmp.eq.s32.totalorder %v189, 15
      %v201 = vrot.slane %v185, 1
      %v202 = vrot.slane %v186, 1
      %vm203 = vcmp.lt.s32.totalorder %v188, 7
      %v204 = vsel %vm203, %v201, %v202
      %v205 = vsel %vm203, %v202, %v201
      %v206 = vsel %vm199, 0.0, %v204
      %v207 = vsel %vm200, 0.0, %v205
      %v208 = vpack.c.bf16 %v198, %v197
      %v209 = vpack.c.bf16 %v186, %v185
      %v210 = vpack.c.bf16 %v207, %v206
      %v211 = vld [vmem:[%s1] sm:$0xf]
      %v212 = vld [vmem:[%s1 + $0x4] sm:$0xf]
      %v213 = vld [vmem:[%s1 + $0x8] sm:$0xf]
      %v214 = vld [vmem:[%s1 + $0xc] sm:$0xf]
      %v215 = vld [vmem:[%s1 + $0x10] sm:$0xf]
      %v216 = vld [vmem:[%s1 + $0x14] sm:$0xf]
      %v217 = vld [vmem:[%s1 + $0x18] sm:$0xf]
      %v218 = vld [vmem:[%s1 + $0x1c] sm:$0xf]
      %v219 = vld [vmem:[%s1 + $0x20] sm:$0xf]
      %v220 = vld [vmem:[%s1 + $0x24] sm:$0xf]
      %v221 = vld [vmem:[%s1 + $0x28] sm:$0xf]
      %v222 = vld [vmem:[%s1 + $0x2c] sm:$0xf]
      %v223 = vld [vmem:[%s1 + $0x30] sm:$0xf]
      %v224 = vld [vmem:[%s1 + $0x34] sm:$0xf]
      %v225 = vld [vmem:[%s1 + $0x38] sm:$0xf]
      %v226 = vld [vmem:[%s1 + $0x3c] sm:$0xf]
      %v227 = vld [vmem:[%s1 + $0x40] sm:$0xf]
      %v228 = vld [vmem:[%s1 + $0x44] sm:$0xf]
      %v229 = vld [vmem:[%s1 + $0x48] sm:$0xf]
      %v230 = vld [vmem:[%s1 + $0x4c] sm:$0xf]
      %v231 = vld [vmem:[%s1 + $0x50] sm:$0xf]
      %v232 = vld [vmem:[%s1 + $0x54] sm:$0xf]
      %v233 = vld [vmem:[%s1 + $0x58] sm:$0xf]
      %v234 = vld [vmem:[%s1 + $0x5c] sm:$0xf]
      %v235 = vld [vmem:[%s1 + $0x60] sm:$0xf]
      %v236 = vld [vmem:[%s1 + $0x64] sm:$0xf]
      %v237 = vld [vmem:[%s1 + $0x68] sm:$0xf]
      %v238 = vld [vmem:[%s1 + $0x6c] sm:$0xf]
      %v239 = vld [vmem:[%s1 + $0x70] sm:$0xf]
      %v240 = vld [vmem:[%s1 + $0x74] sm:$0xf]
      %v241 = vld [vmem:[%s1 + $0x78] sm:$0xf]
      %v242 = vld [vmem:[%s1 + $0x7c] sm:$0xf]
      %v243 = vld [vmem:[%s1 + $0x80] sm:$0xf]
      %v244 = vld [vmem:[%s1 + $0x84] sm:$0xf]
      %v245 = vld [vmem:[%s1 + $0x88] sm:$0xf]
      %v246 = vld [vmem:[%s1 + $0x8c] sm:$0xf]
      %v247 = vld [vmem:[%s1 + $0x90] sm:$0xf]
      %v248 = vld [vmem:[%s1 + $0x94] sm:$0xf]
      %v249 = vld [vmem:[%s1 + $0x98] sm:$0xf]
      %v250 = vld [vmem:[%s1 + $0x9c] sm:$0xf]
      %v251 = vld [vmem:[%s1 + $0xa0] sm:$0xf]
      %v252 = vld [vmem:[%s1 + $0xa4] sm:$0xf]
      %v253 = vld [vmem:[%s1 + $0xa8] sm:$0xf]
      %v254 = vld [vmem:[%s1 + $0xac] sm:$0xf]
      %v255 = vld [vmem:[%s1 + $0xb0] sm:$0xf]
      %v256 = vld [vmem:[%s1 + $0xb4] sm:$0xf]
      %v257 = vld [vmem:[%s1 + $0xb8] sm:$0xf]
      %v258 = vld [vmem:[%s1 + $0xbc] sm:$0xf]
      %v307 = vunpack.c.l.b16 %v211
      %v308 = vunpack.c.l.b16 %v212
      %v309 = vunpack.c.l.b16 %v213
      %v310 = vunpack.c.l.b16 %v214
      %v311 = vunpack.c.l.b16 %v215
      %v312 = vunpack.c.l.b16 %v216
      %v313 = vunpack.c.l.b16 %v217
      %v314 = vunpack.c.l.b16 %v218
      %v315 = vunpack.c.l.b16 %v219
      %v316 = vunpack.c.l.b16 %v220
      %v317 = vunpack.c.l.b16 %v221
      %v318 = vunpack.c.l.b16 %v222
      %v319 = vunpack.c.l.b16 %v223
      %v320 = vunpack.c.l.b16 %v224
      %v321 = vunpack.c.l.b16 %v225
      %v322 = vunpack.c.l.b16 %v226
      %v323 = vunpack.c.l.b16 %v227
      %v324 = vunpack.c.l.b16 %v228
      %v325 = vunpack.c.l.b16 %v229
      %v326 = vunpack.c.l.b16 %v230
      %v327 = vunpack.c.l.b16 %v231
      %v328 = vunpack.c.l.b16 %v232
      %v329 = vunpack.c.l.b16 %v233
      %v330 = vunpack.c.l.b16 %v234
      %v331 = vunpack.c.l.b16 %v235
      %v332 = vunpack.c.l.b16 %v236
      %v333 = vunpack.c.l.b16 %v237
      %v334 = vunpack.c.l.b16 %v238
      %v335 = vunpack.c.l.b16 %v239
      %v336 = vunpack.c.l.b16 %v240
      %v337 = vunpack.c.l.b16 %v241
      %v338 = vunpack.c.l.b16 %v242
      %v339 = vunpack.c.l.b16 %v243
      %v340 = vunpack.c.l.b16 %v244
      %v341 = vunpack.c.l.b16 %v245
      %v342 = vunpack.c.l.b16 %v246
      %v343 = vunpack.c.l.b16 %v247
      %v344 = vunpack.c.l.b16 %v248
      %v345 = vunpack.c.l.b16 %v249
      %v346 = vunpack.c.l.b16 %v250
      %v347 = vunpack.c.l.b16 %v251
      %v348 = vunpack.c.l.b16 %v252
      %v349 = vunpack.c.l.b16 %v253
      %v350 = vunpack.c.l.b16 %v254
      %v351 = vunpack.c.l.b16 %v255
      %v352 = vunpack.c.l.b16 %v256
      %v353 = vunpack.c.l.b16 %v257
      %v354 = vunpack.c.l.b16 %v258
      %v355 = vpack.c.b16 %v308, %v307
      %v356 = vpack.c.b16 %v310, %v309
      %v357 = vpack.c.b16 %v312, %v311
      %v358 = vpack.c.b16 %v314, %v313
      %v359 = vpack.c.b16 %v316, %v315
      %v360 = vpack.c.b16 %v318, %v317
      %v361 = vpack.c.b16 %v320, %v319
      %v362 = vpack.c.b16 %v322, %v321
      %v363 = vpack.c.b16 %v324, %v323
      %v364 = vpack.c.b16 %v326, %v325
      %v365 = vpack.c.b16 %v328, %v327
      %v366 = vpack.c.b16 %v330, %v329
      %v367 = vpack.c.b16 %v332, %v331
      %v368 = vpack.c.b16 %v334, %v333
      %v369 = vpack.c.b16 %v336, %v335
      %v370 = vpack.c.b16 %v338, %v337
      %v371 = vpack.c.b16 %v340, %v339
      %v372 = vpack.c.b16 %v342, %v341
      %v373 = vpack.c.b16 %v344, %v343
      %v374 = vpack.c.b16 %v346, %v345
      %v375 = vpack.c.b16 %v348, %v347
      %v376 = vpack.c.b16 %v350, %v349
      %v377 = vpack.c.b16 %v352, %v351
      %v378 = vpack.c.b16 %v354, %v353
      %403 = vmatprep.subr.bf16.mxu0 0
      %404 = vmatpush1.bf16.msra.mxu0 %v355
      %405 = vmatprep.subr.bf16.mxu0 0
      %406 = vmatpush1.bf16.msra.mxu0 %v356
      %407 = vmatprep.subr.bf16.mxu0 0
      %408 = vmatpush1.bf16.msra.mxu0 %v357
      %409 = vmatprep.subr.bf16.mxu0 0
      %410 = vmatpush1.bf16.msra.mxu0 %v358
      %411 = vmatprep.subr.bf16.mxu0 0
      %412 = vmatpush1.bf16.msra.mxu0 %v359
      %413 = vmatprep.subr.bf16.mxu0 0
      %414 = vmatpush1.bf16.msra.mxu0 %v360
      %415 = vmatprep.subr.bf16.mxu0 0
      %416 = vmatpush1.bf16.msra.mxu0 %v361
      %417 = vmatprep.subr.bf16.mxu0 0
      %418 = vmatpush1.bf16.msra.mxu0 %v362
      %419 = vmatprep.subr.bf16.mxu0 0
      %420 = vmatpush1.bf16.msra.mxu0 %v363
      %421 = vmatprep.subr.bf16.mxu0 0
      %422 = vmatpush1.bf16.msra.mxu0 %v364
      %423 = vmatprep.subr.bf16.mxu0 0
      %424 = vmatpush1.bf16.msra.mxu0 %v365
      %425 = vmatprep.subr.bf16.mxu0 0
      %426 = vmatpush1.bf16.msra.mxu0 %v366
      %427 = vmatprep.subr.bf16.mxu0 0
      %428 = vmatpush1.bf16.msra.mxu0 %v367
      %429 = vmatprep.subr.bf16.mxu0 0
      %430 = vmatpush1.bf16.msra.mxu0 %v368
      %431 = vmatprep.subr.bf16.mxu0 0
      %432 = vmatpush1.bf16.msra.mxu0 %v369
      %433 = vmatprep.subr.bf16.mxu0 0
      %434 = vmatpush1.bf16.msra.mxu0 %v370
      %435 = vmatprep.mubr.bf16.mxu0 %v209
      %436 = vmatmul.mubr.bf16.gmra.mrb[0].mxu0 %v208
      %v437 = vpop.f32.mrb[0].mxu0
      %v438 = vadd.f32 0.0, %v437
      %v439 = vpop.f32.mrb[0].mxu0
      %v440 = vpop.f32.mrb[0].mxu0
      %v441 = vadd.f32 0.0, %v440
      %v442 = vpop.f32.mrb[0].mxu0
      %443 = vdwg.mxu0
      %444 = vmatprep.subr.bf16.mxu0 0
      %445 = vmatpush1.bf16.msra.mxu0 %v371
      %446 = vmatprep.subr.bf16.mxu0 0
      %447 = vmatpush1.bf16.msra.mxu0 %v372
      %448 = vmatprep.subr.bf16.mxu0 0
      %449 = vmatpush1.bf16.msra.mxu0 %v373
      %450 = vmatprep.subr.bf16.mxu0 0
      %451 = vmatpush1.bf16.msra.mxu0 %v374
      %452 = vmatprep.subr.bf16.mxu0 0
      %453 = vmatpush1.bf16.msra.mxu0 %v375
      %454 = vmatprep.subr.bf16.mxu0 0
      %455 = vmatpush1.bf16.msra.mxu0 %v376
      %456 = vmatprep.subr.bf16.mxu0 0
      %457 = vmatpush1.bf16.msra.mxu0 %v377
      %458 = vmatprep.subr.bf16.mxu0 0
      %459 = vmatpush1.bf16.msra.mxu0 %v378
      %460 = vmatprep.subr.bf16.mxu0 0
      %461 = vmatpush1.bf16.msra.mxu0 0
      %462 = vmatprep.subr.bf16.mxu0 0
      %463 = vmatpush1.bf16.msra.mxu0 0
      %464 = vmatprep.subr.bf16.mxu0 0
      %465 = vmatpush1.bf16.msra.mxu0 0
      %466 = vmatprep.subr.bf16.mxu0 0
      %467 = vmatpush1.bf16.msra.mxu0 0
      %468 = vmatprep.subr.bf16.mxu0 0
      %469 = vmatpush1.bf16.msra.mxu0 0
      %470 = vmatprep.subr.bf16.mxu0 0
      %471 = vmatpush1.bf16.msra.mxu0 0
      %472 = vmatprep.subr.bf16.mxu0 0
      %473 = vmatpush1.bf16.msra.mxu0 0
      %474 = vmatprep.subr.bf16.mxu0 0
      %475 = vmatpush1.bf16.msra.mxu0 0
      %476 = vmatprep.mubr.bf16.mxu0 0
      %477 = vmatmul.mubr.bf16.gmra.mrb[0].mxu0 %v210
      %v478 = vpop.f32.mrb[0].mxu0
      %v479 = vadd.f32 %v438, %v478
      %v480 = vpop.f32.mrb[0].mxu0
      %v481 = vpop.f32.mrb[0].mxu0
      %v482 = vadd.f32 %v441, %v481
      %v483 = vpop.f32.mrb[0].mxu0
      %484 = vdwg.mxu0
      %v485 = vadd.f32 %v479, %v482
      %v486 = vrot.slane %v485, 4
      %v487 = vadd.f32 %v485, %v486
      %v488 = vrot.slane %v487, 2
      %v489 = vadd.f32 %v487, %v488
      %v490 = vrot.slane %v489, 1
      %v491 = vadd.f32 %v489, %v490
      %v492 = vmul.f32 %v479, %v479
      %v493 = vmul.f32 %v482, %v482
      %v494 = vadd.f32 %v492, %v493
      %v495 = vrot.slane %v494, 4
      %v496 = vadd.f32 %v494, %v495
      %v497 = vrot.slane %v496, 2
      %v498 = vadd.f32 %v496, %v497
      %v499 = vrot.slane %v498, 1
      %v500 = vadd.f32 %v498, %v499
      %501 = vst [vmem:[%s177] sm:$0xff] %v479
      %502 = vst [vmem:[%s177 + $0x8] sm:$0xff] %v482
      %vm503 = vcmask 1040384
      %v504 = vsel %vm503, %v491, %v500
      %505 = vst [vmem:[%s181] sm:$0x3] %v504
      %p506 = scmp.lt.s32.totalorder %s15, 3
      %s507 = scalar_select %p506, %s15, 3
      %s508 = smul.addr %s507, 2
      %s509 = smul.addr %s508, 8
      %s510 = scalar_lea.vmem %s2, %s509
      %p511 = scmp.lt.s32.totalorder %s15, 3
      %s512 = scalar_select %p511, %s15, 3
      %s513 = smul.addr %s512, 2
      %s514 = scalar_lea.vmem %s3, %s513
      // Predicated region
      $region29: #{block_forward.3} parent=27 // pred_check
        %p515 = pneg %p80
      $region30: #{block_forward.3} parent=27 // pred_check_branch
        %517 = sbr.rel (%p515) target = $region32
      $region31: #{block_forward.3} parent=27 // pred_region
        _
      $region32: #{block_forward.3} parent=27 // pred_fallthru
        _
      // Predicated region
      $region33: #{block_forward.3} parent=27 // pred_check
        %p518 = pneg %p106
      $region34: #{block_forward.3} parent=27 // pred_check_branch
        %520 = sbr.rel (%p518) target = $region36
      $region35: #{block_forward.3} parent=27 // pred_region
        _
      $region36: #{block_forward.3} parent=27 // pred_fallthru
        _
    $region28: #{block_forward.3} parent=5 // pred_fallthru
      _
    %p521 = scmp.le.s32.totalorder 2, %s10
    // Predicated region
    $region37: #{block_forward.3} parent=5 // pred_check
      %p522 = pneg %p521
    $region38: #{block_forward.3} parent=5 // pred_check_branch
      %524 = sbr.rel (%p522) target = $region40
    $region39: #{block_forward.3} parent=5 // pred_region
      %s525 = ssub.s32 %s10, 2
      // Predicated region
      $region41: #{block_forward.3} parent=39 // pred_check
        %p526 = pneg %p86
      $region42: #{block_forward.3} parent=39 // pred_check_branch
        %528 = sbr.rel (%p526) target = $region44
      $region43: #{block_forward.3} parent=39 // pred_region
        %p529 = scmp.lt.s32.totalorder %s16, 3
        %s530 = scalar_select %p529, %s16, 3
        %s531 = smul.addr %s530, 2
        %s532 = smul.addr %s531, 8
        %s533 = scalar_lea.vmem %s2, %s532
      $region44: #{block_forward.3} parent=39 // pred_fallthru
        _
      // Predicated region
      $region45: #{block_forward.3} parent=39 // pred_check
        %p534 = pneg %p112
      $region46: #{block_forward.3} parent=39 // pred_check_branch
        %536 = sbr.rel (%p534) target = $region48
      $region47: #{block_forward.3} parent=39 // pred_region
        %p537 = scmp.lt.s32.totalorder %s16, 3
        %s538 = scalar_select %p537, %s16, 3
        %s539 = smul.addr %s538, 2
        %s540 = scalar_lea.vmem %s3, %s539
      $region48: #{block_forward.3} parent=39 // pred_fallthru
        _
    $region40: #{block_forward.3} parent=5 // pred_fallthru
      _
  $region6: #{block_forward.3} parent=0 // loop_footer
    %s14 = sadd.s32 1, %s10
  $region7: #{block_forward.3} parent=0 // loop_footer_branch
    %9 = sbr.rel target = $region3
  $region8: #{block_forward.3} parent=0 // loop_exit
    _

// kernel: block_forward.5
$region0: #{block_forward.5}
  #allocation0 [shape = 'u32[]', space=smem, size = 0x4, offset = 0x4, fixed_abs, tag = 'smem constant byte address 0x4 - core index']
  #allocation1 [shape = 'u32[144,128]{1,0:T(1,128)}', space=vmem, size = 0x12000, scoped, tag = 'internal scratch']
  %s0 = inlined_call_operand.vmem [shape: f32[4,16,128], index: 0, kind: input, shape index: {}]
  %s1 = inlined_call_operand.vmem [shape: f32[1,128], index: 1, kind: input, shape index: {}]
  %s2 = inlined_call_operand.vmem [shape: f32[1,128], index: 2, kind: input, shape index: {}]
  %s3 = inlined_call_operand.vmem [shape: f32[4,16,128], index: 3, kind: output, shape index: {}]
  %s4 = sld [smem:[#allocation0]]
  $region45: #{block_forward.5} parent=0
    _
  %s6 = ssub.s32 1, %s4
  %s7 = scalar_select 0, %s6, %s4
  loop: start=0, step=1, limit=6
  $region2: #{block_forward.5} parent=0 // loop_pre_header
    _
  $region3: #{block_forward.5} parent=0 // loop_header
    %s9 = sphi 0, %s13
    %p10 = scmp.ge.s32.totalorder %s9, 6
    %s19 = sphi 0, %s21
    %s22 = sphi 0, %s19
    %s23 = sphi 0, %s22
    %s39 = sphi 0, %s23
    %s43 = sphi 0, %s43
    %s45 = sphi 0, %s43
    %s46 = sphi 0, %s45
    %s60 = sphi 0, %s46
    %s64 = sphi 0, %s64
    %s66 = sphi 0, %s64
    %s67 = sphi 0, %s66
    %s81 = sphi 0, %s67
    %s87 = sphi 0, %s89
    %s90 = sphi 0, %s87
    %s91 = sphi 0, %s90
    %s107 = sphi 0, %s91
  $region4: #{block_forward.5} parent=0 // loop_header_branch
    %12 = sbr.rel (%p10) target = $region8
  $region5: #{block_forward.5} parent=0 // loop_body
    %s14 = ssub.s32 %s9, 1
    %s15 = ssub.s32 %s9, 2
    %s16 = sadd.s32 %s9, 1
    %s17 = ssub.s32 %s9, %s16
    %p18 = scmp.eq.s32.totalorder %s17, 0
    %s20 = sadd.s32 %s19, 1
    %s21 = scalar_select %p18, %s19, %s20
    %p24 = pneg %p18
    %p25 = scmp.eq.s32.totalorder %s9, 3
    %p26 = por %p24, %p25
    %p27 = scmp.ne.s32.totalorder %s19, %s22
    %p28 = scmp.eq.s32.totalorder %s9, 0
    %p29 = por %p27, %p28
    %p30 = scmp.ne.s32.totalorder %s19, %s22
    %p31 = scmp.eq.s32.totalorder %s14, 3
    %p32 = por %p30, %p31
    %p33 = scmp.ne.s32.totalorder %s22, %s23
    %p34 = scmp.eq.s32.totalorder %s14, 0
    %p35 = por %p33, %p34
    %p36 = scmp.ne.s32.totalorder %s22, %s23
    %p37 = scmp.eq.s32.totalorder %s15, 3
    %p38 = por %p36, %p37
    %p40 = scmp.ne.s32.totalorder %s23, %s39
    %p41 = scmp.eq.s32.totalorder %s15, 0
    %p42 = por %p40, %p41
    %s44 = sadd.s32 %s43, 1
    %p47 = scmp.eq.s32.totalorder %s9, 3
    %p48 = scmp.ne.s32.totalorder %s43, %s45
    %p49 = scmp.eq.s32.totalorder %s9, 0
    %p50 = por %p48, %p49
    %p51 = scmp.ne.s32.totalorder %s43, %s45
    %p52 = scmp.eq.s32.totalorder %s14, 3
    %p53 = por %p51, %p52
    %p54 = scmp.ne.s32.totalorder %s45, %s46
    %p55 = scmp.eq.s32.totalorder %s14, 0
    %p56 = por %p54, %p55
    %p57 = scmp.ne.s32.totalorder %s45, %s46
    %p58 = scmp.eq.s32.totalorder %s15, 3
    %p59 = por %p57, %p58
    %p61 = scmp.ne.s32.totalorder %s46, %s60
    %p62 = scmp.eq.s32.totalorder %s15, 0
    %p63 = por %p61, %p62
    %s65 = sadd.s32 %s64, 1
    %p68 = scmp.eq.s32.totalorder %s9, 3
    %p69 = scmp.ne.s32.totalorder %s64, %s66
    %p70 = scmp.eq.s32.totalorder %s9, 0
    %p71 = por %p69, %p70
    %p72 = scmp.ne.s32.totalorder %s64, %s66
    %p73 = scmp.eq.s32.totalorder %s14, 3
    %p74 = por %p72, %p73
    %p75 = scmp.ne.s32.totalorder %s66, %s67
    %p76 = scmp.eq.s32.totalorder %s14, 0
    %p77 = por %p75, %p76
    %p78 = scmp.ne.s32.totalorder %s66, %s67
    %p79 = scmp.eq.s32.totalorder %s15, 3
    %p80 = por %p78, %p79
    %p82 = scmp.ne.s32.totalorder %s67, %s81
    %p83 = scmp.eq.s32.totalorder %s15, 0
    %p84 = por %p82, %p83
    %s85 = ssub.s32 %s9, %s16
    %p86 = scmp.eq.s32.totalorder %s85, 0
    %s88 = sadd.s32 %s87, 1
    %s89 = scalar_select %p86, %s87, %s88
    %p92 = pneg %p86
    %p93 = scmp.eq.s32.totalorder %s9, 3
    %p94 = por %p92, %p93
    %p95 = scmp.ne.s32.totalorder %s87, %s90
    %p96 = scmp.eq.s32.totalorder %s9, 0
    %p97 = por %p95, %p96
    %p98 = scmp.ne.s32.totalorder %s87, %s90
    %p99 = scmp.eq.s32.totalorder %s14, 3
    %p100 = por %p98, %p99
    %p101 = scmp.ne.s32.totalorder %s90, %s91
    %p102 = scmp.eq.s32.totalorder %s14, 0
    %p103 = por %p101, %p102
    %p104 = scmp.ne.s32.totalorder %s90, %s91
    %p105 = scmp.eq.s32.totalorder %s15, 3
    %p106 = por %p104, %p105
    %p108 = scmp.ne.s32.totalorder %s91, %s107
    %p109 = scmp.eq.s32.totalorder %s15, 0
    %p110 = por %p108, %p109
    %p111 = scmp.le.s32.totalorder 1, %s9
    %p112 = scmp.lt.s32.totalorder %s9, 5
    %p113 = pnand %p111, %p112
    %p114 = pneg %p113
    // Predicated region
    $region9: #{block_forward.5} parent=5 // pred_check
      _
    $region10: #{block_forward.5} parent=5 // pred_check_branch
      %116 = sbr.rel (%p113) target = $region12
    $region11: #{block_forward.5} parent=5 // pred_region
      %s117 = ssub.s32 %s9, 1
      // Predicated region
      $region13: #{block_forward.5} parent=11 // pred_check
        %p118 = pneg %p56
      $region14: #{block_forward.5} parent=11 // pred_check_branch
        %120 = sbr.rel (%p118) target = $region16
      $region15: #{block_forward.5} parent=11 // pred_region
        _
      $region16: #{block_forward.5} parent=11 // pred_fallthru
        _
      // Predicated region
      $region17: #{block_forward.5} parent=11 // pred_check
        %p121 = pneg %p77
      $region18: #{block_forward.5} parent=11 // pred_check_branch
        %123 = sbr.rel (%p121) target = $region20
      $region19: #{block_forward.5} parent=11 // pred_region
        _
      $region20: #{block_forward.5} parent=11 // pred_fallthru
        _
    $region12: #{block_forward.5} parent=5 // pred_fallthru
      _
    %p124 = scmp.lt.s32.totalorder %s9, 4
    // Predicated region
    $region21: #{block_forward.5} parent=5 // pred_check
      %p125 = pneg %p124
    $region22: #{block_forward.5} parent=5 // pred_check_branch
      %127 = sbr.rel (%p125) target = $region24
    $region23: #{block_forward.5} parent=5 // pred_region
      // Predicated region
      $region25: #{block_forward.5} parent=23 // pred_check
        %p128 = pneg %p29
      $region26: #{block_forward.5} parent=23 // pred_check_branch
        %130 = sbr.rel (%p128) target = $region28
      $region27: #{block_forward.5} parent=23 // pred_region
        %p131 = scmp.lt.s32.totalorder %s9, 3
        %s132 = scalar_select %p131, %s9, 3
        %s133 = smul.addr %s132, 2
        %s134 = smul.addr %s133, 8
        %s135 = scalar_lea.vmem %s0, %s134
      $region28: #{block_forward.5} parent=23 // pred_fallthru
        _
    $region24: #{block_forward.5} parent=5 // pred_fallthru
      _
    %p136 = scmp.le.s32.totalorder 1, %s9
    %p137 = scmp.lt.s32.totalorder %s9, 5
    %p138 = pnand %p136, %p137
    %p139 = pneg %p138
    // Predicated region
    $region29: #{block_forward.5} parent=5 // pred_check
      _
    $region30: #{block_forward.5} parent=5 // pred_check_branch
      %141 = sbr.rel (%p138) target = $region32
    $region31: #{block_forward.5} parent=5 // pred_region
      %s142 = ssub.s32 %s9, 1
      %p143 = scmp.lt.s32.totalorder %s14, 3
      %s144 = scalar_select %p143, %s14, 3
      %s145 = smul.addr %s144, 2
      %s146 = smul.addr %s145, 8
      %s147 = scalar_lea.vmem %s0, %s146
      %p148 = pneg %p35
      %p149 = pneg %p32
      %p150 = pneg %p56
      %p151 = pneg %p53
      %p152 = pneg %p77
      %p153 = pneg %p74
      %p154 = pneg %p103
      %p155 = pneg %p100
      %p156 = scmp.lt.s32.totalorder %s14, 3
      %s157 = scalar_select %p156, %s14, 3
      %s158 = smul.addr %s157, 2
      %s159 = smul.addr %s158, 8
      %s160 = scalar_lea.vmem %s3, %s159
      %p161 = scmp.lt.s32.totalorder %s14, 3
      %s162 = scalar_select %p161, %s14, 3
      %s163 = smul.addr %s162, 2
      %s164 = smul.addr %s163, 8
      %s165 = scalar_lea.vmem %s0, %s164
      %p166 = scmp.lt.s32.totalorder %s14, 3
      %s167 = scalar_select %p166, %s14, 3
      %s168 = smul.addr %s167, 2
      %s169 = smul.addr %s168, 8
      %s170 = scalar_lea.vmem %s3, %s169
      %v171 = vld [vmem:[%s165] sm:$0xff]
      %v172 = vld [vmem:[%s165 + $0x8] sm:$0xff]
      %v173 = vld [vmem:[%s1] sm:$0x1]
      %v175 = vlaneseq
      %v176 = vshrl.u32 %v175, 7
      %v177 = vsub.s32 0, %v176
      %v178 = vrot.slane %v173, %v177
      %v180 = vmul.f32 %v171, %v178
      %v181 = vmul.f32 %v172, %v178
      %v182 = vld [vmem:[%s2] sm:$0x1]
      %v184 = vlaneseq
      %v185 = vshrl.u32 %v184, 7
      %v186 = vsub.s32 0, %v185
      %v187 = vrot.slane %v182, %v186
      %v189 = vadd.f32 %v180, %v187
      %v190 = vadd.f32 %v181, %v187
      %v191 = vmax.f32 %v189, 0.0
      %v192 = vmax.f32 %v190, 0.0
      %193 = vst [vmem:[%s170] sm:$0xff] %v191
      %194 = vst [vmem:[%s170 + $0x8] sm:$0xff] %v192
      %p195 = scmp.lt.s32.totalorder %s14, 3
      %s196 = scalar_select %p195, %s14, 3
      %s197 = smul.addr %s196, 2
      %s198 = smul.addr %s197, 8
      %s199 = scalar_lea.vmem %s3, %s198
      // Predicated region
      $region33: #{block_forward.5} parent=31 // pred_check
        %p200 = pneg %p100
      $region34: #{block_forward.5} parent=31 // pred_check_branch
        %202 = sbr.rel (%p200) target = $region36
      $region35: #{block_forward.5} parent=31 // pred_region
        _
      $region36: #{block_forward.5} parent=31 // pred_fallthru
        _
    $region32: #{block_forward.5} parent=5 // pred_fallthru
      _
    %p203 = scmp.le.s32.totalorder 2, %s9
    // Predicated region
    $region37: #{block_forward.5} parent=5 // pred_check
      %p204 = pneg %p203
    $region38: #{block_forward.5} parent=5 // pred_check_branch
      %206 = sbr.rel (%p204) target = $region40
    $region39: #{block_forward.5} parent=5 // pred_region
      %s207 = ssub.s32 %s9, 2
      // Predicated region
      $region41: #{block_forward.5} parent=39 // pred_check
        %p208 = pneg %p106
      $region42: #{block_forward.5} parent=39 // pred_check_branch
        %210 = sbr.rel (%p208) target = $region44
      $region43: #{block_forward.5} parent=39 // pred_region
        %p211 = scmp.lt.s32.totalorder %s15, 3
        %s212 = scalar_select %p211, %s15, 3
        %s213 = smul.addr %s212, 2
        %s214 = smul.addr %s213, 8
        %s215 = scalar_lea.vmem %s3, %s214
      $region44: #{block_forward.5} parent=39 // pred_fallthru
        _
    $region40: #{block_forward.5} parent=5 // pred_fallthru
      _
  $region6: #{block_forward.5} parent=0 // loop_footer
    %s13 = sadd.s32 1, %s9
  $region7: #{block_forward.5} parent=0 // loop_footer_branch
    %8 = sbr.rel target = $region3
  $region8: #{block_forward.5} parent=0 // loop_exit
    _

// kernel: block_forward.4
$region0: #{block_forward.4}
  #allocation0 [shape = 'u32[]', space=smem, size = 0x4, offset = 0x4, fixed_abs, tag = 'smem constant byte address 0x4 - core index']
  #allocation1 [shape = 'u32[144,128]{1,0:T(1,128)}', space=vmem, size = 0x12000, scoped, tag = 'internal scratch']
  %s0 = inlined_call_operand.vmem [shape: f32[4,16,128], index: 0, kind: input, shape index: {}]
  %s1 = inlined_call_operand.vmem [shape: f32[1,128], index: 1, kind: input, shape index: {}]
  %s2 = inlined_call_operand.vmem [shape: f32[1,128], index: 2, kind: input, shape index: {}]
  %s3 = inlined_call_operand.vmem [shape: bf16[384,128], index: 3, kind: input, shape index: {}]
  %s4 = inlined_call_operand.vmem [shape: f32[4,16,128], index: 4, kind: output, shape index: {0}]
  %s5 = inlined_call_operand.vmem [shape: f32[4,2,128], index: 5, kind: output, shape index: {1}]
  %6 = xla_tuple %s4, %s5
  %s7 = sld [smem:[#allocation0]]
  $region57: #{block_forward.4} parent=0
    _
  %s9 = ssub.s32 1, %s7
  %s10 = scalar_select 0, %s9, %s7
  loop: start=0, step=1, limit=6
  $region2: #{block_forward.4} parent=0 // loop_pre_header
    _
  $region3: #{block_forward.4} parent=0 // loop_header
    %s12 = sphi 0, %s16
    %p13 = scmp.ge.s32.totalorder %s12, 6
    %s22 = sphi 0, %s24
    %s25 = sphi 0, %s22
    %s26 = sphi 0, %s25
    %s42 = sphi 0, %s26
    %s46 = sphi 0, %s46
    %s48 = sphi 0, %s46
    %s49 = sphi 0, %s48
    %s63 = sphi 0, %s49
    %s67 = sphi 0, %s67
    %s69 = sphi 0, %s67
    %s70 = sphi 0, %s69
    %s84 = sphi 0, %s70
    %s88 = sphi 0, %s88
    %s90 = sphi 0, %s88
    %s91 = sphi 0, %s90
    %s105 = sphi 0, %s91
    %s111 = sphi 0, %s113
    %s114 = sphi 0, %s111
    %s115 = sphi 0, %s114
    %s131 = sphi 0, %s115
    %s137 = sphi 0, %s139
    %s140 = sphi 0, %s137
    %s141 = sphi 0, %s140
    %s157 = sphi 0, %s141
  $region4: #{block_forward.4} parent=0 // loop_header_branch
    %15 = sbr.rel (%p13) target = $region8
  $region5: #{block_forward.4} parent=0 // loop_body
    %s17 = ssub.s32 %s12, 1
    %s18 = ssub.s32 %s12, 2
    %s19 = sadd.s32 %s12, 1
    %s20 = ssub.s32 %s12, %s19
    %p21 = scmp.eq.s32.totalorder %s20, 0
    %s23 = sadd.s32 %s22, 1
    %s24 = scalar_select %p21, %s22, %s23
    %p27 = pneg %p21
    %p28 = scmp.eq.s32.totalorder %s12, 3
    %p29 = por %p27, %p28
    %p30 = scmp.ne.s32.totalorder %s22, %s25
    %p31 = scmp.eq.s32.totalorder %s12, 0
    %p32 = por %p30, %p31
    %p33 = scmp.ne.s32.totalorder %s22, %s25
    %p34 = scmp.eq.s32.totalorder %s17, 3
    %p35 = por %p33, %p34
    %p36 = scmp.ne.s32.totalorder %s25, %s26
    %p37 = scmp.eq.s32.totalorder %s17, 0
    %p38 = por %p36, %p37
    %p39 = scmp.ne.s32.totalorder %s25, %s26
    %p40 = scmp.eq.s32.totalorder %s18, 3
    %p41 = por %p39, %p40
    %p43 = scmp.ne.s32.totalorder %s26, %s42
    %p44 = scmp.eq.s32.totalorder %s18, 0
    %p45 = por %p43, %p44
    %s47 = sadd.s32 %s46, 1
    %p50 = scmp.eq.s32.totalorder %s12, 3
    %p51 = scmp.ne.s32.totalorder %s46, %s48
    %p52 = scmp.eq.s32.totalorder %s12, 0
    %p53 = por %p51, %p52
    %p54 = scmp.ne.s32.totalorder %s46, %s48
    %p55 = scmp.eq.s32.totalorder %s17, 3
    %p56 = por %p54, %p55
    %p57 = scmp.ne.s32.totalorder %s48, %s49
    %p58 = scmp.eq.s32.totalorder %s17, 0
    %p59 = por %p57, %p58
    %p60 = scmp.ne.s32.totalorder %s48, %s49
    %p61 = scmp.eq.s32.totalorder %s18, 3
    %p62 = por %p60, %p61
    %p64 = scmp.ne.s32.totalorder %s49, %s63
    %p65 = scmp.eq.s32.totalorder %s18, 0
    %p66 = por %p64, %p65
    %s68 = sadd.s32 %s67, 1
    %p71 = scmp.eq.s32.totalorder %s12, 3
    %p72 = scmp.ne.s32.totalorder %s67, %s69
    %p73 = scmp.eq.s32.totalorder %s12, 0
    %p74 = por %p72, %p73
    %p75 = scmp.ne.s32.totalorder %s67, %s69
    %p76 = scmp.eq.s32.totalorder %s17, 3
    %p77 = por %p75, %p76
    %p78 = scmp.ne.s32.totalorder %s69, %s70
    %p79 = scmp.eq.s32.totalorder %s17, 0
    %p80 = por %p78, %p79
    %p81 = scmp.ne.s32.totalorder %s69, %s70
    %p82 = scmp.eq.s32.totalorder %s18, 3
    %p83 = por %p81, %p82
    %p85 = scmp.ne.s32.totalorder %s70, %s84
    %p86 = scmp.eq.s32.totalorder %s18, 0
    %p87 = por %p85, %p86
    %s89 = sadd.s32 %s88, 1
    %p92 = scmp.eq.s32.totalorder %s12, 3
    %p93 = scmp.ne.s32.totalorder %s88, %s90
    %p94 = scmp.eq.s32.totalorder %s12, 0
    %p95 = por %p93, %p94
    %p96 = scmp.ne.s32.totalorder %s88, %s90
    %p97 = scmp.eq.s32.totalorder %s17, 3
    %p98 = por %p96, %p97
    %p99 = scmp.ne.s32.totalorder %s90, %s91
    %p100 = scmp.eq.s32.totalorder %s17, 0
    %p101 = por %p99, %p100
    %p102 = scmp.ne.s32.totalorder %s90, %s91
    %p103 = scmp.eq.s32.totalorder %s18, 3
    %p104 = por %p102, %p103
    %p106 = scmp.ne.s32.totalorder %s91, %s105
    %p107 = scmp.eq.s32.totalorder %s18, 0
    %p108 = por %p106, %p107
    %s109 = ssub.s32 %s12, %s19
    %p110 = scmp.eq.s32.totalorder %s109, 0
    %s112 = sadd.s32 %s111, 1
    %s113 = scalar_select %p110, %s111, %s112
    %p116 = pneg %p110
    %p117 = scmp.eq.s32.totalorder %s12, 3
    %p118 = por %p116, %p117
    %p119 = scmp.ne.s32.totalorder %s111, %s114
    %p120 = scmp.eq.s32.totalorder %s12, 0
    %p121 = por %p119, %p120
    %p122 = scmp.ne.s32.totalorder %s111, %s114
    %p123 = scmp.eq.s32.totalorder %s17, 3
    %p124 = por %p122, %p123
    %p125 = scmp.ne.s32.totalorder %s114, %s115
    %p126 = scmp.eq.s32.totalorder %s17, 0
    %p127 = por %p125, %p126
    %p128 = scmp.ne.s32.totalorder %s114, %s115
    %p129 = scmp.eq.s32.totalorder %s18, 3
    %p130 = por %p128, %p129
    %p132 = scmp.ne.s32.totalorder %s115, %s131
    %p133 = scmp.eq.s32.totalorder %s18, 0
    %p134 = por %p132, %p133
    %s135 = ssub.s32 %s12, %s19
    %p136 = scmp.eq.s32.totalorder %s135, 0
    %s138 = sadd.s32 %s137, 1
    %s139 = scalar_select %p136, %s137, %s138
    %p142 = pneg %p136
    %p143 = scmp.eq.s32.totalorder %s12, 3
    %p144 = por %p142, %p143
    %p145 = scmp.ne.s32.totalorder %s137, %s140
    %p146 = scmp.eq.s32.totalorder %s12, 0
    %p147 = por %p145, %p146
    %p148 = scmp.ne.s32.totalorder %s137, %s140
    %p149 = scmp.eq.s32.totalorder %s17, 3
    %p150 = por %p148, %p149
    %p151 = scmp.ne.s32.totalorder %s140, %s141
    %p152 = scmp.eq.s32.totalorder %s17, 0
    %p153 = por %p151, %p152
    %p154 = scmp.ne.s32.totalorder %s140, %s141
    %p155 = scmp.eq.s32.totalorder %s18, 3
    %p156 = por %p154, %p155
    %p158 = scmp.ne.s32.totalorder %s141, %s157
    %p159 = scmp.eq.s32.totalorder %s18, 0
    %p160 = por %p158, %p159
    %p161 = scmp.le.s32.totalorder 1, %s12
    %p162 = scmp.lt.s32.totalorder %s12, 5
    %p163 = pnand %p161, %p162
    %p164 = pneg %p163
    // Predicated region
    $region9: #{block_forward.4} parent=5 // pred_check
      _
    $region10: #{block_forward.4} parent=5 // pred_check_branch
      %166 = sbr.rel (%p163) target = $region12
    $region11: #{block_forward.4} parent=5 // pred_region
      %s167 = ssub.s32 %s12, 1
      // Predicated region
      $region13: #{block_forward.4} parent=11 // pred_check
        %p168 = pneg %p59
      $region14: #{block_forward.4} parent=11 // pred_check_branch
        %170 = sbr.rel (%p168) target = $region16
      $region15: #{block_forward.4} parent=11 // pred_region
        _
      $region16: #{block_forward.4} parent=11 // pred_fallthru
        _
      // Predicated region
      $region17: #{block_forward.4} parent=11 // pred_check
        %p171 = pneg %p80
      $region18: #{block_forward.4} parent=11 // pred_check_branch
        %173 = sbr.rel (%p171) target = $region20
      $region19: #{block_forward.4} parent=11 // pred_region
        _
      $region20: #{block_forward.4} parent=11 // pred_fallthru
        _
      // Predicated region
      $region21: #{block_forward.4} parent=11 // pred_check
        %p174 = pneg %p101
      $region22: #{block_forward.4} parent=11 // pred_check_branch
        %176 = sbr.rel (%p174) target = $region24
      $region23: #{block_forward.4} parent=11 // pred_region
        _
      $region24: #{block_forward.4} parent=11 // pred_fallthru
        _
    $region12: #{block_forward.4} parent=5 // pred_fallthru
      _
    %p177 = scmp.lt.s32.totalorder %s12, 4
    // Predicated region
    $region25: #{block_forward.4} parent=5 // pred_check
      %p178 = pneg %p177
    $region26: #{block_forward.4} parent=5 // pred_check_branch
      %180 = sbr.rel (%p178) target = $region28
    $region27: #{block_forward.4} parent=5 // pred_region
      // Predicated region
      $region29: #{block_forward.4} parent=27 // pred_check
        %p181 = pneg %p32
      $region30: #{block_forward.4} parent=27 // pred_check_branch
        %183 = sbr.rel (%p181) target = $region32
      $region31: #{block_forward.4} parent=27 // pred_region
        %p184 = scmp.lt.s32.totalorder %s12, 3
        %s185 = scalar_select %p184, %s12, 3
        %s186 = smul.addr %s185, 2
        %s187 = smul.addr %s186, 8
        %s188 = scalar_lea.vmem %s0, %s187
      $region32: #{block_forward.4} parent=27 // pred_fallthru
        _
    $region28: #{block_forward.4} parent=5 // pred_fallthru
      _
    %p189 = scmp.le.s32.totalorder 1, %s12
    %p190 = scmp.lt.s32.totalorder %s12, 5
    %p191 = pnand %p189, %p190
    %p192 = pneg %p191
    // Predicated region
    $region33: #{block_forward.4} parent=5 // pred_check
      _
    $region34: #{block_forward.4} parent=5 // pred_check_branch
      %194 = sbr.rel (%p191) target = $region36
    $region35: #{block_forward.4} parent=5 // pred_region
      %s195 = ssub.s32 %s12, 1
      %p196 = scmp.lt.s32.totalorder %s17, 3
      %s197 = scalar_select %p196, %s17, 3
      %s198 = smul.addr %s197, 2
      %s199 = smul.addr %s198, 8
      %s200 = scalar_lea.vmem %s0, %s199
      %p201 = pneg %p38
      %p202 = pneg %p35
      %p203 = pneg %p59
      %p204 = pneg %p56
      %p205 = pneg %p80
      %p206 = pneg %p77
      %p207 = pneg %p101
      %p208 = pneg %p98
      %p209 = pneg %p127
      %p210 = pneg %p124
      %p211 = scmp.lt.s32.totalorder %s17, 3
      %s212 = scalar_select %p211, %s17, 3
      %s213 = smul.addr %s212, 2
      %s214 = smul.addr %s213, 8
      %s215 = scalar_lea.vmem %s4, %s214
      %p216 = pneg %p153
      %p217 = pneg %p150
      %p218 = scmp.lt.s32.totalorder %s17, 3
      %s219 = scalar_select %p218, %s17, 3
      %s220 = smul.addr %s219, 2
      %s221 = scalar_lea.vmem %s5, %s220
      %p222 = scmp.lt.s32.totalorder %s17, 3
      %s223 = scalar_select %p222, %s17, 3
      %s224 = smul.addr %s223, 2
      %s225 = smul.addr %s224, 8
      %s226 = scalar_lea.vmem %s0, %s225
      %p227 = scmp.lt.s32.totalorder %s17, 3
      %s228 = scalar_select %p227, %s17, 3
      %s229 = smul.addr %s228, 2
      %s230 = smul.addr %s229, 8
      %s231 = scalar_lea.vmem %s4, %s230
      %p232 = scmp.lt.s32.totalorder %s17, 3
      %s233 = scalar_select %p232, %s17, 3
      %s234 = smul.addr %s233, 2
      %s235 = scalar_lea.vmem %s5, %s234
      %v237 = vld [vmem:[%s226] sm:$0xff]
      %v238 = vld [vmem:[%s226 + $0x8] sm:$0xff]
      %v239 = vld [vmem:[%s1] sm:$0x1]
      %v241 = vlaneseq
      %v242 = vshrl.u32 %v241, 7
      %v243 = vsub.s32 0, %v242
      %v244 = vrot.slane %v239, %v243
      %v246 = vmul.f32 %v237, %v244
      %v247 = vmul.f32 %v238, %v244
      %v248 = vld [vmem:[%s2] sm:$0x1]
      %v250 = vlaneseq
      %v251 = vshrl.u32 %v250, 7
      %v252 = vsub.s32 0, %v251
      %v253 = vrot.slane %v248, %v252
      %v255 = vadd.f32 %v246, %v253
      %v256 = vadd.f32 %v247, %v253
      %v257 = vmax.f32 %v255, 0.0
      %v258 = vmax.f32 %v256, 0.0
      %v259 = vlaneseq
      %v260 = vshrl.u32 %v259, 7
      %v261 = vadd.s32 %v260, 8
      %vm262 = vcmp.eq.s32.totalorder %v260, 0
      %vm263 = vcmp.eq.s32.totalorder %v261, 0
      %v264 = vrot.slane %v257, 7
      %v265 = vrot.slane %v258, 7
      %vm266 = vcmp.lt.s32.totalorder %v260, 1
      %v267 = vsel %vm266, %v264, %v265
      %v268 = vsel %vm266, %v265, %v264
      %v269 = vsel %vm262, 0.0, %v268
      %v270 = vsel %vm263, 0.0, %v267
      %vm271 = vcmp.eq.s32.totalorder %v260, 15
      %vm272 = vcmp.eq.s32.totalorder %v261, 15
      %v273 = vrot.slane %v257, 1
      %v274 = vrot.slane %v258, 1
      %vm275 = vcmp.lt.s32.totalorder %v260, 7
      %v276 = vsel %vm275, %v273, %v274
      %v277 = vsel %vm275, %v274, %v273
      %v278 = vsel %vm271, 0.0, %v276
      %v279 = vsel %vm272, 0.0, %v277
      %v280 = vpack.c.bf16 %v270, %v269
      %v281 = vpack.c.bf16 %v258, %v257
      %v282 = vpack.c.bf16 %v279, %v278
      %v283 = vld [vmem:[%s3] sm:$0xf]
      %v284 = vld [vmem:[%s3 + $0x4] sm:$0xf]
      %v285 = vld [vmem:[%s3 + $0x8] sm:$0xf]
      %v286 = vld [vmem:[%s3 + $0xc] sm:$0xf]
      %v287 = vld [vmem:[%s3 + $0x10] sm:$0xf]
      %v288 = vld [vmem:[%s3 + $0x14] sm:$0xf]
      %v289 = vld [vmem:[%s3 + $0x18] sm:$0xf]
      %v290 = vld [vmem:[%s3 + $0x1c] sm:$0xf]
      %v291 = vld [vmem:[%s3 + $0x20] sm:$0xf]
      %v292 = vld [vmem:[%s3 + $0x24] sm:$0xf]
      %v293 = vld [vmem:[%s3 + $0x28] sm:$0xf]
      %v294 = vld [vmem:[%s3 + $0x2c] sm:$0xf]
      %v295 = vld [vmem:[%s3 + $0x30] sm:$0xf]
      %v296 = vld [vmem:[%s3 + $0x34] sm:$0xf]
      %v297 = vld [vmem:[%s3 + $0x38] sm:$0xf]
      %v298 = vld [vmem:[%s3 + $0x3c] sm:$0xf]
      %v299 = vld [vmem:[%s3 + $0x40] sm:$0xf]
      %v300 = vld [vmem:[%s3 + $0x44] sm:$0xf]
      %v301 = vld [vmem:[%s3 + $0x48] sm:$0xf]
      %v302 = vld [vmem:[%s3 + $0x4c] sm:$0xf]
      %v303 = vld [vmem:[%s3 + $0x50] sm:$0xf]
      %v304 = vld [vmem:[%s3 + $0x54] sm:$0xf]
      %v305 = vld [vmem:[%s3 + $0x58] sm:$0xf]
      %v306 = vld [vmem:[%s3 + $0x5c] sm:$0xf]
      %v307 = vld [vmem:[%s3 + $0x60] sm:$0xf]
      %v308 = vld [vmem:[%s3 + $0x64] sm:$0xf]
      %v309 = vld [vmem:[%s3 + $0x68] sm:$0xf]
      %v310 = vld [vmem:[%s3 + $0x6c] sm:$0xf]
      %v311 = vld [vmem:[%s3 + $0x70] sm:$0xf]
      %v312 = vld [vmem:[%s3 + $0x74] sm:$0xf]
      %v313 = vld [vmem:[%s3 + $0x78] sm:$0xf]
      %v314 = vld [vmem:[%s3 + $0x7c] sm:$0xf]
      %v315 = vld [vmem:[%s3 + $0x80] sm:$0xf]
      %v316 = vld [vmem:[%s3 + $0x84] sm:$0xf]
      %v317 = vld [vmem:[%s3 + $0x88] sm:$0xf]
      %v318 = vld [vmem:[%s3 + $0x8c] sm:$0xf]
      %v319 = vld [vmem:[%s3 + $0x90] sm:$0xf]
      %v320 = vld [vmem:[%s3 + $0x94] sm:$0xf]
      %v321 = vld [vmem:[%s3 + $0x98] sm:$0xf]
      %v322 = vld [vmem:[%s3 + $0x9c] sm:$0xf]
      %v323 = vld [vmem:[%s3 + $0xa0] sm:$0xf]
      %v324 = vld [vmem:[%s3 + $0xa4] sm:$0xf]
      %v325 = vld [vmem:[%s3 + $0xa8] sm:$0xf]
      %v326 = vld [vmem:[%s3 + $0xac] sm:$0xf]
      %v327 = vld [vmem:[%s3 + $0xb0] sm:$0xf]
      %v328 = vld [vmem:[%s3 + $0xb4] sm:$0xf]
      %v329 = vld [vmem:[%s3 + $0xb8] sm:$0xf]
      %v330 = vld [vmem:[%s3 + $0xbc] sm:$0xf]
      %v379 = vunpack.c.l.b16 %v283
      %v380 = vunpack.c.l.b16 %v284
      %v381 = vunpack.c.l.b16 %v285
      %v382 = vunpack.c.l.b16 %v286
      %v383 = vunpack.c.l.b16 %v287
      %v384 = vunpack.c.l.b16 %v288
      %v385 = vunpack.c.l.b16 %v289
      %v386 = vunpack.c.l.b16 %v290
      %v387 = vunpack.c.l.b16 %v291
      %v388 = vunpack.c.l.b16 %v292
      %v389 = vunpack.c.l.b16 %v293
      %v390 = vunpack.c.l.b16 %v294
      %v391 = vunpack.c.l.b16 %v295
      %v392 = vunpack.c.l.b16 %v296
      %v393 = vunpack.c.l.b16 %v297
      %v394 = vunpack.c.l.b16 %v298
      %v395 = vunpack.c.l.b16 %v299
      %v396 = vunpack.c.l.b16 %v300
      %v397 = vunpack.c.l.b16 %v301
      %v398 = vunpack.c.l.b16 %v302
      %v399 = vunpack.c.l.b16 %v303
      %v400 = vunpack.c.l.b16 %v304
      %v401 = vunpack.c.l.b16 %v305
      %v402 = vunpack.c.l.b16 %v306
      %v403 = vunpack.c.l.b16 %v307
      %v404 = vunpack.c.l.b16 %v308
      %v405 = vunpack.c.l.b16 %v309
      %v406 = vunpack.c.l.b16 %v310
      %v407 = vunpack.c.l.b16 %v311
      %v408 = vunpack.c.l.b16 %v312
      %v409 = vunpack.c.l.b16 %v313
      %v410 = vunpack.c.l.b16 %v314
      %v411 = vunpack.c.l.b16 %v315
      %v412 = vunpack.c.l.b16 %v316
      %v413 = vunpack.c.l.b16 %v317
      %v414 = vunpack.c.l.b16 %v318
      %v415 = vunpack.c.l.b16 %v319
      %v416 = vunpack.c.l.b16 %v320
      %v417 = vunpack.c.l.b16 %v321
      %v418 = vunpack.c.l.b16 %v322
      %v419 = vunpack.c.l.b16 %v323
      %v420 = vunpack.c.l.b16 %v324
      %v421 = vunpack.c.l.b16 %v325
      %v422 = vunpack.c.l.b16 %v326
      %v423 = vunpack.c.l.b16 %v327
      %v424 = vunpack.c.l.b16 %v328
      %v425 = vunpack.c.l.b16 %v329
      %v426 = vunpack.c.l.b16 %v330
      %v427 = vpack.c.b16 %v380, %v379
      %v428 = vpack.c.b16 %v382, %v381
      %v429 = vpack.c.b16 %v384, %v383
      %v430 = vpack.c.b16 %v386, %v385
      %v431 = vpack.c.b16 %v388, %v387
      %v432 = vpack.c.b16 %v390, %v389
      %v433 = vpack.c.b16 %v392, %v391
      %v434 = vpack.c.b16 %v394, %v393
      %v435 = vpack.c.b16 %v396, %v395
      %v436 = vpack.c.b16 %v398, %v397
      %v437 = vpack.c.b16 %v400, %v399
      %v438 = vpack.c.b16 %v402, %v401
      %v439 = vpack.c.b16 %v404, %v403
      %v440 = vpack.c.b16 %v406, %v405
      %v441 = vpack.c.b16 %v408, %v407
      %v442 = vpack.c.b16 %v410, %v409
      %v443 = vpack.c.b16 %v412, %v411
      %v444 = vpack.c.b16 %v414, %v413
      %v445 = vpack.c.b16 %v416, %v415
      %v446 = vpack.c.b16 %v418, %v417
      %v447 = vpack.c.b16 %v420, %v419
      %v448 = vpack.c.b16 %v422, %v421
      %v449 = vpack.c.b16 %v424, %v423
      %v450 = vpack.c.b16 %v426, %v425
      %475 = vmatprep.subr.bf16.mxu0 0
      %476 = vmatpush1.bf16.msra.mxu0 %v427
      %477 = vmatprep.subr.bf16.mxu0 0
      %478 = vmatpush1.bf16.msra.mxu0 %v428
      %479 = vmatprep.subr.bf16.mxu0 0
      %480 = vmatpush1.bf16.msra.mxu0 %v429
      %481 = vmatprep.subr.bf16.mxu0 0
      %482 = vmatpush1.bf16.msra.mxu0 %v430
      %483 = vmatprep.subr.bf16.mxu0 0
      %484 = vmatpush1.bf16.msra.mxu0 %v431
      %485 = vmatprep.subr.bf16.mxu0 0
      %486 = vmatpush1.bf16.msra.mxu0 %v432
      %487 = vmatprep.subr.bf16.mxu0 0
      %488 = vmatpush1.bf16.msra.mxu0 %v433
      %489 = vmatprep.subr.bf16.mxu0 0
      %490 = vmatpush1.bf16.msra.mxu0 %v434
      %491 = vmatprep.subr.bf16.mxu0 0
      %492 = vmatpush1.bf16.msra.mxu0 %v435
      %493 = vmatprep.subr.bf16.mxu0 0
      %494 = vmatpush1.bf16.msra.mxu0 %v436
      %495 = vmatprep.subr.bf16.mxu0 0
      %496 = vmatpush1.bf16.msra.mxu0 %v437
      %497 = vmatprep.subr.bf16.mxu0 0
      %498 = vmatpush1.bf16.msra.mxu0 %v438
      %499 = vmatprep.subr.bf16.mxu0 0
      %500 = vmatpush1.bf16.msra.mxu0 %v439
      %501 = vmatprep.subr.bf16.mxu0 0
      %502 = vmatpush1.bf16.msra.mxu0 %v440
      %503 = vmatprep.subr.bf16.mxu0 0
      %504 = vmatpush1.bf16.msra.mxu0 %v441
      %505 = vmatprep.subr.bf16.mxu0 0
      %506 = vmatpush1.bf16.msra.mxu0 %v442
      %507 = vmatprep.mubr.bf16.mxu0 %v281
      %508 = vmatmul.mubr.bf16.gmra.mrb[0].mxu0 %v280
      %v509 = vpop.f32.mrb[0].mxu0
      %v510 = vadd.f32 0.0, %v509
      %v511 = vpop.f32.mrb[0].mxu0
      %v512 = vpop.f32.mrb[0].mxu0
      %v513 = vadd.f32 0.0, %v512
      %v514 = vpop.f32.mrb[0].mxu0
      %515 = vdwg.mxu0
      %516 = vmatprep.subr.bf16.mxu0 0
      %517 = vmatpush1.bf16.msra.mxu0 %v443
      %518 = vmatprep.subr.bf16.mxu0 0
      %519 = vmatpush1.bf16.msra.mxu0 %v444
      %520 = vmatprep.subr.bf16.mxu0 0
      %521 = vmatpush1.bf16.msra.mxu0 %v445
      %522 = vmatprep.subr.bf16.mxu0 0
      %523 = vmatpush1.bf16.msra.mxu0 %v446
      %524 = vmatprep.subr.bf16.mxu0 0
      %525 = vmatpush1.bf16.msra.mxu0 %v447
      %526 = vmatprep.subr.bf16.mxu0 0
      %527 = vmatpush1.bf16.msra.mxu0 %v448
      %528 = vmatprep.subr.bf16.mxu0 0
      %529 = vmatpush1.bf16.msra.mxu0 %v449
      %530 = vmatprep.subr.bf16.mxu0 0
      %531 = vmatpush1.bf16.msra.mxu0 %v450
      %532 = vmatprep.subr.bf16.mxu0 0
      %533 = vmatpush1.bf16.msra.mxu0 0
      %534 = vmatprep.subr.bf16.mxu0 0
      %535 = vmatpush1.bf16.msra.mxu0 0
      %536 = vmatprep.subr.bf16.mxu0 0
      %537 = vmatpush1.bf16.msra.mxu0 0
      %538 = vmatprep.subr.bf16.mxu0 0
      %539 = vmatpush1.bf16.msra.mxu0 0
      %540 = vmatprep.subr.bf16.mxu0 0
      %541 = vmatpush1.bf16.msra.mxu0 0
      %542 = vmatprep.subr.bf16.mxu0 0
      %543 = vmatpush1.bf16.msra.mxu0 0
      %544 = vmatprep.subr.bf16.mxu0 0
      %545 = vmatpush1.bf16.msra.mxu0 0
      %546 = vmatprep.subr.bf16.mxu0 0
      %547 = vmatpush1.bf16.msra.mxu0 0
      %548 = vmatprep.mubr.bf16.mxu0 0
      %549 = vmatmul.mubr.bf16.gmra.mrb[0].mxu0 %v282
      %v550 = vpop.f32.mrb[0].mxu0
      %v551 = vadd.f32 %v510, %v550
      %v552 = vpop.f32.mrb[0].mxu0
      %v553 = vpop.f32.mrb[0].mxu0
      %v554 = vadd.f32 %v513, %v553
      %v555 = vpop.f32.mrb[0].mxu0
      %556 = vdwg.mxu0
      %v557 = vadd.f32 %v551, %v554
      %v558 = vrot.slane %v557, 4
      %v559 = vadd.f32 %v557, %v558
      %v560 = vrot.slane %v559, 2
      %v561 = vadd.f32 %v559, %v560
      %v562 = vrot.slane %v561, 1
      %v563 = vadd.f32 %v561, %v562
      %v564 = vmul.f32 %v551, %v551
      %v565 = vmul.f32 %v554, %v554
      %v566 = vadd.f32 %v564, %v565
      %v567 = vrot.slane %v566, 4
      %v568 = vadd.f32 %v566, %v567
      %v569 = vrot.slane %v568, 2
      %v570 = vadd.f32 %v568, %v569
      %v571 = vrot.slane %v570, 1
      %v572 = vadd.f32 %v570, %v571
      %573 = vst [vmem:[%s231] sm:$0xff] %v551
      %574 = vst [vmem:[%s231 + $0x8] sm:$0xff] %v554
      %vm575 = vcmask 1040384
      %v576 = vsel %vm575, %v563, %v572
      %577 = vst [vmem:[%s235] sm:$0x3] %v576
      %p578 = scmp.lt.s32.totalorder %s17, 3
      %s579 = scalar_select %p578, %s17, 3
      %s580 = smul.addr %s579, 2
      %s581 = smul.addr %s580, 8
      %s582 = scalar_lea.vmem %s4, %s581
      %p583 = scmp.lt.s32.totalorder %s17, 3
      %s584 = scalar_select %p583, %s17, 3
      %s585 = smul.addr %s584, 2
      %s586 = scalar_lea.vmem %s5, %s585
      // Predicated region
      $region37: #{block_forward.4} parent=35 // pred_check
        %p587 = pneg %p124
      $region38: #{block_forward.4} parent=35 // pred_check_branch
        %589 = sbr.rel (%p587) target = $region40
      $region39: #{block_forward.4} parent=35 // pred_region
        _
      $region40: #{block_forward.4} parent=35 // pred_fallthru
        _
      // Predicated region
      $region41: #{block_forward.4} parent=35 // pred_check
        %p590 = pneg %p150
      $region42: #{block_forward.4} parent=35 // pred_check_branch
        %592 = sbr.rel (%p590) target = $region44
      $region43: #{block_forward.4} parent=35 // pred_region
        _
      $region44: #{block_forward.4} parent=35 // pred_fallthru
        _
    $region36: #{block_forward.4} parent=5 // pred_fallthru
      _
    %p593 = scmp.le.s32.totalorder 2, %s12
    // Predicated region
    $region45: #{block_forward.4} parent=5 // pred_check
      %p594 = pneg %p593
    $region46: #{block_forward.4} parent=5 // pred_check_branch
      %596 = sbr.rel (%p594) target = $region48
    $region47: #{block_forward.4} parent=5 // pred_region
      %s597 = ssub.s32 %s12, 2
      // Predicated region
      $region49: #{block_forward.4} parent=47 // pred_check
        %p598 = pneg %p130
      $region50: #{block_forward.4} parent=47 // pred_check_branch
        %600 = sbr.rel (%p598) target = $region52
      $region51: #{block_forward.4} parent=47 // pred_region
        %p601 = scmp.lt.s32.totalorder %s18, 3
        %s602 = scalar_select %p601, %s18, 3
        %s603 = smul.addr %s602, 2
        %s604 = smul.addr %s603, 8
        %s605 = scalar_lea.vmem %s4, %s604
      $region52: #{block_forward.4} parent=47 // pred_fallthru
        _
      // Predicated region
      $region53: #{block_forward.4} parent=47 // pred_check
        %p606 = pneg %p156
      $region54: #{block_forward.4} parent=47 // pred_check_branch
        %608 = sbr.rel (%p606) target = $region56
      $region55: #{block_forward.4} parent=47 // pred_region
        %p609 = scmp.lt.s32.totalorder %s18, 3
        %s610 = scalar_select %p609, %s18, 3
        %s611 = smul.addr %s610, 2
        %s612 = scalar_lea.vmem %s5, %s611
      $region56: #{block_forward.4} parent=47 // pred_fallthru
        _
    $region48: #{block_forward.4} parent=5 // pred_fallthru
      _
  $region6: #{block_forward.4} parent=0 // loop_footer
    %s16 = sadd.s32 1, %s12
  $region7: #{block_forward.4} parent=0 // loop_footer_branch
    %11 = sbr.rel target = $region3
  $region8: #{block_forward.4} parent=0 // loop_exit
    _

</llo_original>
